<compile_context>
chip_gen: v7x
topology: tpu7x:2x2x1
jax: 0.10.0
libtpu: 0.0.40
codegen_flags: <defaults>
</compile_context>

<pallas_src>
import functools

import numpy as np
import jax
import jax.numpy as jnp
from jax import lax
from jax.experimental import pallas as pl
from jax.experimental.pallas import tpu as pltpu

BN_EPS = 1e-5
VMEM_LIMIT_BYTES = 32 * 1024 * 1024


def _make_select_matrix(H, W):
    """(H*W, H2*W2) 0/1 matrix implementing the stride-2 spatial subsample.

    x_flat(C, H*W) @ P picks columns (2*h2, 2*w2).  Entries are 0/1 and each
    output column has exactly one non-zero, so a bf16 MXU matmul reproduces the
    selected bf16 values exactly.
    """
    H2, W2 = (H + 1) // 2, (W + 1) // 2
    P = np.zeros((H * W, H2 * W2), dtype=np.float32)
    h2 = np.arange(H2)
    w2 = np.arange(W2)
    src = (2 * h2[:, None]) * W + 2 * w2[None, :]   # source flat index (H2, W2)
    dst = h2[:, None] * W2 + w2[None, :]            # dest   flat index (H2, W2)
    P[src.reshape(-1), dst.reshape(-1)] = 1.0
    return P


def _fused_kernel(x_ref, psel_ref, w1_ref, gamma_ref, beta_ref, res_ref, w2_ref,
                  out_ref,
                  y_scr, sum_scr, sq_scr, scale_scr, shift_scr,
                  *, n_batch, n_spatial):
    p = pl.program_id(0)   # phase: 0 = stats, 1 = apply
    n = pl.program_id(1)   # batch index

    @pl.when((p == 0) & (n == 0))
    def _init():
        sum_scr[...] = jnp.zeros_like(sum_scr)
        sq_scr[...] = jnp.zeros_like(sq_scr)

    @pl.when(p == 0)
    def _stats_phase():
        # In-kernel stride-2 subsample + bf16 cast (no wrapper prep pass).
        x_bf = x_ref[0].astype(jnp.bfloat16)                       # (C_in, H*W)
        sub = jnp.dot(x_bf, psel_ref[...],
                      preferred_element_type=jnp.float32)          # (C_in, S) exact select
        w1_bf = w1_ref[...].astype(jnp.bfloat16)
        y = jnp.dot(w1_bf, sub.astype(jnp.bfloat16),
                    preferred_element_type=jnp.float32)            # (C_mid, S)
        y_scr[n] = y                                               # VMEM stash for phase 1
        # BN sums stay in VMEM scratch (no per-step narrow HBM stores).
        # TODO(synk): E[y^2]-E[y]^2 in f32 can cancel for large-mean channels.
        sum_scr[...] += jnp.sum(y, axis=1, keepdims=True)
        sq_scr[...] += jnp.sum(y * y, axis=1, keepdims=True)

    @pl.when((p == 1) & (n == 0))
    def _finalize():
        count = jnp.float32(n_batch * n_spatial)
        mean = sum_scr[...] / count
        var = jnp.maximum(sq_scr[...] / count - mean * mean, 0.0)
        inv_std = lax.rsqrt(var + BN_EPS)                          # EUP
        scale = gamma_ref[...] * inv_std
        scale_scr[...] = scale
        shift_scr[...] = beta_ref[...] - mean * scale

    @pl.when(p == 1)
    def _apply_phase():
        z = y_scr[n] * scale_scr[...] + shift_scr[...]             # folded BN affine
        a = jnp.maximum(z + res_ref[0], 0.0).astype(jnp.bfloat16)  # +residual, ReLU
        w2_bf = w2_ref[...].astype(jnp.bfloat16)
        out_ref[0] = jnp.dot(w2_bf, a,
                             preferred_element_type=jnp.float32).astype(out_ref.dtype)


@jax.jit
def model_forward(x78, x86, w1, gamma, beta, w2):
    """Pallas forward for M: conv1x1/s2 -> BN(train) -> add -> ReLU -> conv1x1.

    x78:   (N, C_in, H, W)     NCHW
    x86:   (N, C_mid, H2, W2)  NCHW residual
    w1:    (C_mid, C_in)       conv2d27 weight ((out, in, 1, 1) squeezed)
    gamma: (C_mid,), beta: (C_mid,)
    w2:    (C_out, C_mid)      conv2d28 weight
    returns (N, C_out, H2, W2) f32
    """
    N, C_in, H, W = x78.shape
    C_mid = w1.shape[0]
    C_out = w2.shape[0]
    H2, W2 = (H + 1) // 2, (W + 1) // 2
    S = H2 * W2
    HW = H * W

    # Wrapper does *free* reshapes only -- no slice / pad / cast passes.
    x_flat = x78.reshape(N, C_in, HW)
    res = x86.reshape(N, C_mid, S)
    gamma_c = gamma.reshape(C_mid, 1)
    beta_c = beta.reshape(C_mid, 1)
    psel = jnp.asarray(_make_select_matrix(H, W), dtype=jnp.bfloat16)  # baked constant

    last_n = N - 1
    kernel = functools.partial(_fused_kernel, n_batch=N, n_spatial=S)

    out = pl.pallas_call(
        kernel,
        out_shape=jax.ShapeDtypeStruct((N, C_out, S), jnp.float32),
        grid=(2, N),  # (phase, batch); phase-major so stats complete before apply
        in_specs=[
            # x78: real batch blocks in phase 0, pinned to the last-visited block
            # in phase 1 so it is never re-DMA'd for the apply phase.
            pl.BlockSpec((1, C_in, HW),
                         lambda p, n: (n * (1 - p) + last_n * p, 0, 0)),
            pl.BlockSpec((HW, S), lambda p, n: (0, 0)),          # Psel (resident)
            pl.BlockSpec((C_mid, C_in), lambda p, n: (0, 0)),    # w1   (resident)
            pl.BlockSpec((C_mid, 1), lambda p, n: (0, 0)),       # gamma
            pl.BlockSpec((C_mid, 1), lambda p, n: (0, 0)),       # beta
            # residual: pinned to block 0 during phase 0 (fetched once, reused at
            # phase-1 n=0), then per-batch in phase 1.
            pl.BlockSpec((1, C_mid, S), lambda p, n: (n * p, 0, 0)),
            pl.BlockSpec((C_out, C_mid), lambda p, n: (0, 0)),   # w2   (resident)
        ],
        out_specs=pl.BlockSpec((1, C_out, S), lambda p, n: (n * p, 0, 0)),
        scratch_shapes=[
            pltpu.VMEM((N, C_mid, S), jnp.float32),  # y stash across phases
            pltpu.VMEM((C_mid, 1), jnp.float32),     # sum(y)
            pltpu.VMEM((C_mid, 1), jnp.float32),     # sum(y^2)
            pltpu.VMEM((C_mid, 1), jnp.float32),     # folded BN scale
            pltpu.VMEM((C_mid, 1), jnp.float32),     # folded BN shift
        ],
        compiler_params=pltpu.CompilerParams(
            # Both axes are reductions/barriers for the batch statistics.
            dimension_semantics=("arbitrary", "arbitrary"),
            vmem_limit_bytes=VMEM_LIMIT_BYTES),
    )(x_flat, psel, w1, gamma_c, beta_c, res, w2)

    return out.reshape(N, C_out, H2, W2)


def reference_forward(x78, x86, w1, gamma, beta, w2):
    """Pure-JAX reference matching PyTorch training-mode BN semantics.

    Matmul operands are rounded to bf16 (as the kernel feeds the MXU) so the
    comparison isolates kernel-structure error from the dtype choice.
    """
    hp = lax.Precision.HIGHEST
    xs = x78[:, :, ::2, ::2].astype(jnp.bfloat16).astype(jnp.float32)
    w1f = w1.astype(jnp.bfloat16).astype(jnp.float32)
    w2f = w2.astype(jnp.bfloat16).astype(jnp.float32)
    y = jnp.einsum('oi,nihw->nohw', w1f, xs, precision=hp)
    mean = jnp.mean(y, axis=(0, 2, 3), keepdims=True)
    var = jnp.var(y, axis=(0, 2, 3), keepdims=True)      # biased, like torch train BN
    z = (y - mean) * lax.rsqrt(var + BN_EPS)
    z = z * gamma[None, :, None, None] + beta[None, :, None, None]
    a = jnp.maximum(z + x86, 0.0).astype(jnp.bfloat16).astype(jnp.float32)
    return jnp.einsum('oi,nihw->nohw', w2f, a, precision=hp)


if __name__ == "__main__":
    # Small shapes consistent with the module structure
    # (original: N=1, C_in=512, C_mid=1024, C_out=256, H=W=28; scaled down here).
    N, C_in, C_mid, C_out, H, W = 2, 128, 256, 64, 16, 16
    H2, W2 = (H + 1) // 2, (W + 1) // 2

    key = jax.random.PRNGKey(0)
    k1, k2, k3, k4, k5, k6 = jax.random.split(key, 6)

    x78 = jax.random.normal(k1, (N, C_in, H, W), dtype=jnp.float32)
    x86 = jax.random.normal(k2, (N, C_mid, H2, W2), dtype=jnp.float32)

    # Conv weights in native PyTorch (out, in, 1, 1) layout, squeezed to (out, in).
    w1 = jax.random.normal(k3, (C_mid, C_in), dtype=jnp.float32) * 0.05
    w2 = jax.random.normal(k4, (C_out, C_mid), dtype=jnp.float32) * 0.05
    gamma = 1.0 + 0.1 * jax.random.normal(k5, (C_mid,), dtype=jnp.float32)
    beta = 0.1 * jax.random.normal(k6, (C_mid,), dtype=jnp.float32)

    out = jax.block_until_ready(model_forward(x78, x86, w1, gamma, beta, w2))
    ref = reference_forward(x78, x86, w1, gamma, beta, w2)

    assert out.shape == (N, C_out, H2, W2), out.shape
    max_err = float(jnp.max(jnp.abs(out - ref)))
    assert max_err < 1e-2, f"max_err={max_err}"

    print("KERNEL_OK")
</pallas_src>

<mosaic_0001>
module attributes {stable_mosaic.version = 11 : i64} {
  func.func @_fused_kernel(%arg0: i32, %arg1: i32, %arg2: memref<1x128x256xf32, #tpu.memory_space<vmem>>, %arg3: memref<256x64xbf16, #tpu.memory_space<vmem>>, %arg4: memref<256x128xf32, #tpu.memory_space<vmem>>, %arg5: memref<256x1xf32, #tpu.memory_space<vmem>>, %arg6: memref<256x1xf32, #tpu.memory_space<vmem>>, %arg7: memref<1x256x64xf32, #tpu.memory_space<vmem>>, %arg8: memref<64x256xf32, #tpu.memory_space<vmem>>, %arg9: memref<1x64x64xf32, #tpu.memory_space<vmem>>, %arg10: memref<2x256x64xf32, #tpu.memory_space<vmem>>, %arg11: memref<256x1xf32, #tpu.memory_space<vmem>>, %arg12: memref<256x1xf32, #tpu.memory_space<vmem>>, %arg13: memref<256x1xf32, #tpu.memory_space<vmem>>, %arg14: memref<256x1xf32, #tpu.memory_space<vmem>>) attributes {dimension_semantics = [#tpu.dimension_semantics<arbitrary>, #tpu.dimension_semantics<arbitrary>], iteration_bounds = array<i64: 2, 2>, scalar_prefetch = 0 : i64, scratch_operands = 5 : i64, tpu.core_type = #tpu.core_type<tc>, window_params = [{transform_indices = @transform_0, window_bounds = array<i64: 1, 128, 256>}, {pipeline_mode = #tpu.pipeline_mode<synchronous>, transform_indices = @transform_1, window_bounds = array<i64: 256, 64>}, {pipeline_mode = #tpu.pipeline_mode<synchronous>, transform_indices = @transform_2, window_bounds = array<i64: 256, 128>}, {pipeline_mode = #tpu.pipeline_mode<synchronous>, transform_indices = @transform_3, window_bounds = array<i64: 256, 1>}, {pipeline_mode = #tpu.pipeline_mode<synchronous>, transform_indices = @transform_4, window_bounds = array<i64: 256, 1>}, {transform_indices = @transform_5, window_bounds = array<i64: 1, 256, 64>}, {pipeline_mode = #tpu.pipeline_mode<synchronous>, transform_indices = @transform_6, window_bounds = array<i64: 64, 256>}, {transform_indices = @transform_7, window_bounds = array<i64: 1, 64, 64>}]} {
    %c0_i32 = arith.constant 0 : i32
    %0 = arith.cmpi eq, %arg0, %c0_i32 : i32
    %c0_i32_0 = arith.constant 0 : i32
    %1 = arith.cmpi eq, %arg1, %c0_i32_0 : i32
    %2 = arith.andi %0, %1 : i1
    %3 = arith.extui %2 : i1 to i32
    %c0_i32_1 = arith.constant 0 : i32
    %4 = arith.cmpi ne, %3, %c0_i32_1 : i32
    scf.if %4 {
      %cst = arith.constant 0.000000e+00 : f32
      %16 = vector.broadcast %cst : f32 to vector<256x1xf32>
      %c0 = arith.constant 0 : index
      %c0_8 = arith.constant 0 : index
      %17 = vector.load %arg11[%c0, %c0_8] : memref<256x1xf32, #tpu.memory_space<vmem>>, vector<256x1xf32>
      tpu.vector_store %arg11[%c0, %c0_8], %16 {strides = array<i32>} : memref<256x1xf32, #tpu.memory_space<vmem>>, vector<256x1xf32>,
      %cst_9 = arith.constant 0.000000e+00 : f32
      %18 = vector.broadcast %cst_9 : f32 to vector<256x1xf32>
      %c0_10 = arith.constant 0 : index
      %c0_11 = arith.constant 0 : index
      %19 = vector.load %arg12[%c0_10, %c0_11] : memref<256x1xf32, #tpu.memory_space<vmem>>, vector<256x1xf32>
      tpu.vector_store %arg12[%c0_10, %c0_11], %18 {strides = array<i32>} : memref<256x1xf32, #tpu.memory_space<vmem>>, vector<256x1xf32>,
    } else {
    }
    %c0_i32_2 = arith.constant 0 : i32
    %5 = arith.cmpi eq, %arg0, %c0_i32_2 : i32
    %6 = arith.extui %5 : i1 to i32
    %c0_i32_3 = arith.constant 0 : i32
    %7 = arith.cmpi ne, %6, %c0_i32_3 : i32
    scf.if %7 {
      %c0 = arith.constant 0 : index
      %c0_8 = arith.constant 0 : index
      %c0_9 = arith.constant 0 : index
      %16 = vector.load %arg2[%c0, %c0_8, %c0_9] : memref<1x128x256xf32, #tpu.memory_space<vmem>>, vector<1x128x256xf32>
      %17 = vector.shape_cast %16 : vector<1x128x256xf32> to vector<128x256xf32>
      %18 = arith.truncf %17 : vector<128x256xf32> to vector<128x256xbf16>
      %c0_10 = arith.constant 0 : index
      %c0_11 = arith.constant 0 : index
      %19 = vector.load %arg3[%c0_10, %c0_11] : memref<256x64xbf16, #tpu.memory_space<vmem>>, vector<256x64xbf16>
      %cst = arith.constant dense<0.000000e+00> : vector<128x64xf32>
      %20 = tpu.matmul %18, %19, %cst {dimension_numbers = #tpu.dot_dimension_numbers<[1], [0], [0], [1], [0, 0, 1, 1], [], []>} : vector<128x256xbf16>, vector<256x64xbf16>, vector<128x64xf32> -> vector<128x64xf32>
      %c0_12 = arith.constant 0 : index
      %c0_13 = arith.constant 0 : index
      %21 = vector.load %arg4[%c0_12, %c0_13] : memref<256x128xf32, #tpu.memory_space<vmem>>, vector<256x128xf32>
      %22 = arith.truncf %21 : vector<256x128xf32> to vector<256x128xbf16>
      %23 = arith.truncf %20 : vector<128x64xf32> to vector<128x64xbf16>
      %cst_14 = arith.constant dense<0.000000e+00> : vector<256x64xf32>
      %24 = tpu.matmul %22, %23, %cst_14 {dimension_numbers = #tpu.dot_dimension_numbers<[1], [0], [0], [1], [0, 0, 1, 1], [], []>} : vector<256x128xbf16>, vector<128x64xbf16>, vector<256x64xf32> -> vector<256x64xf32>
      %25 = arith.index_cast %arg1 : i32 to index
      %c0_15 = arith.constant 0 : index
      %c0_16 = arith.constant 0 : index
      %26 = vector.load %arg10[%25, %c0_15, %c0_16] : memref<2x256x64xf32, #tpu.memory_space<vmem>>, vector<1x256x64xf32>
      %27 = vector.shape_cast %26 : vector<1x256x64xf32> to vector<256x64xf32>
      %28 = vector.shape_cast %24 : vector<256x64xf32> to vector<1x256x64xf32>
      tpu.vector_store %arg10[%25, %c0_15, %c0_16], %28 {strides = array<i32>} : memref<2x256x64xf32, #tpu.memory_space<vmem>>, vector<1x256x64xf32>,
      %c0_17 = arith.constant 0 : index
      %c0_18 = arith.constant 0 : index
      %29 = vector.load %arg11[%c0_17, %c0_18] : memref<256x1xf32, #tpu.memory_space<vmem>>, vector<256x1xf32>
      %cst_19 = arith.constant dense<0.000000e+00> : vector<256xf32>
      %30 = vector.multi_reduction <add>, %24, %cst_19 [1] : vector<256x64xf32> to vector<256xf32>
      %31 = vector.shape_cast %30 : vector<256xf32> to vector<256x1xf32>
      %32 = arith.addf %29, %31 : vector<256x1xf32>
      %c0_20 = arith.constant 0 : index
      %c0_21 = arith.constant 0 : index
      %33 = vector.load %arg11[%c0_20, %c0_21] : memref<256x1xf32, #tpu.memory_space<vmem>>, vector<256x1xf32>
      tpu.vector_store %arg11[%c0_20, %c0_21], %32 {strides = array<i32>} : memref<256x1xf32, #tpu.memory_space<vmem>>, vector<256x1xf32>,
      %c0_22 = arith.constant 0 : index
      %c0_23 = arith.constant 0 : index
      %34 = vector.load %arg12[%c0_22, %c0_23] : memref<256x1xf32, #tpu.memory_space<vmem>>, vector<256x1xf32>
      %35 = arith.mulf %24, %24 : vector<256x64xf32>
      %cst_24 = arith.constant dense<0.000000e+00> : vector<256xf32>
      %36 = vector.multi_reduction <add>, %35, %cst_24 [1] : vector<256x64xf32> to vector<256xf32>
      %37 = vector.shape_cast %36 : vector<256xf32> to vector<256x1xf32>
      %38 = arith.addf %34, %37 : vector<256x1xf32>
      %c0_25 = arith.constant 0 : index
      %c0_26 = arith.constant 0 : index
      %39 = vector.load %arg12[%c0_25, %c0_26] : memref<256x1xf32, #tpu.memory_space<vmem>>, vector<256x1xf32>
      tpu.vector_store %arg12[%c0_25, %c0_26], %38 {strides = array<i32>} : memref<256x1xf32, #tpu.memory_space<vmem>>, vector<256x1xf32>,
    } else {
    }
    %c1_i32 = arith.constant 1 : i32
    %8 = arith.cmpi eq, %arg0, %c1_i32 : i32
    %c0_i32_4 = arith.constant 0 : i32
    %9 = arith.cmpi eq, %arg1, %c0_i32_4 : i32
    %10 = arith.andi %8, %9 : i1
    %11 = arith.extui %10 : i1 to i32
    %c0_i32_5 = arith.constant 0 : i32
    %12 = arith.cmpi ne, %11, %c0_i32_5 : i32
    scf.if %12 {
      %c0 = arith.constant 0 : index
      %c0_8 = arith.constant 0 : index
      %16 = vector.load %arg11[%c0, %c0_8] : memref<256x1xf32, #tpu.memory_space<vmem>>, vector<256x1xf32>
      %cst = arith.constant 1.280000e+02 : f32
      %17 = vector.broadcast %cst : f32 to vector<256x1xf32>
      %18 = arith.divf %16, %17 : vector<256x1xf32>
      %c0_9 = arith.constant 0 : index
      %c0_10 = arith.constant 0 : index
      %19 = vector.load %arg12[%c0_9, %c0_10] : memref<256x1xf32, #tpu.memory_space<vmem>>, vector<256x1xf32>
      %cst_11 = arith.constant 1.280000e+02 : f32
      %20 = vector.broadcast %cst_11 : f32 to vector<256x1xf32>
      %21 = arith.divf %19, %20 : vector<256x1xf32>
      %22 = arith.mulf %18, %18 : vector<256x1xf32>
      %23 = arith.subf %21, %22 : vector<256x1xf32>
      %cst_12 = arith.constant 0.000000e+00 : f32
      %24 = vector.broadcast %cst_12 : f32 to vector<256x1xf32>
      %25 = arith.maximumf %23, %24 : vector<256x1xf32>
      %cst_13 = arith.constant 9.99999974E-6 : f32
      %26 = vector.broadcast %cst_13 : f32 to vector<256x1xf32>
      %27 = arith.addf %25, %26 : vector<256x1xf32>
      %28 = math.rsqrt %27 : vector<256x1xf32>
      %c0_14 = arith.constant 0 : index
      %c0_15 = arith.constant 0 : index
      %29 = vector.load %arg5[%c0_14, %c0_15] : memref<256x1xf32, #tpu.memory_space<vmem>>, vector<256x1xf32>
      %30 = arith.mulf %29, %28 : vector<256x1xf32>
      %c0_16 = arith.constant 0 : index
      %c0_17 = arith.constant 0 : index
      %31 = vector.load %arg13[%c0_16, %c0_17] : memref<256x1xf32, #tpu.memory_space<vmem>>, vector<256x1xf32>
      tpu.vector_store %arg13[%c0_16, %c0_17], %30 {strides = array<i32>} : memref<256x1xf32, #tpu.memory_space<vmem>>, vector<256x1xf32>,
      %c0_18 = arith.constant 0 : index
      %c0_19 = arith.constant 0 : index
      %32 = vector.load %arg6[%c0_18, %c0_19] : memref<256x1xf32, #tpu.memory_space<vmem>>, vector<256x1xf32>
      %33 = arith.mulf %18, %30 : vector<256x1xf32>
      %34 = arith.subf %32, %33 : vector<256x1xf32>
      %c0_20 = arith.constant 0 : index
      %c0_21 = arith.constant 0 : index
      %35 = vector.load %arg14[%c0_20, %c0_21] : memref<256x1xf32, #tpu.memory_space<vmem>>, vector<256x1xf32>
      tpu.vector_store %arg14[%c0_20, %c0_21], %34 {strides = array<i32>} : memref<256x1xf32, #tpu.memory_space<vmem>>, vector<256x1xf32>,
    } else {
    }
    %c1_i32_6 = arith.constant 1 : i32
    %13 = arith.cmpi eq, %arg0, %c1_i32_6 : i32
    %14 = arith.extui %13 : i1 to i32
    %c0_i32_7 = arith.constant 0 : i32
    %15 = arith.cmpi ne, %14, %c0_i32_7 : i32
    scf.if %15 {
      %16 = arith.index_cast %arg1 : i32 to index
      %c0 = arith.constant 0 : index
      %c0_8 = arith.constant 0 : index
      %17 = vector.load %arg10[%16, %c0, %c0_8] : memref<2x256x64xf32, #tpu.memory_space<vmem>>, vector<1x256x64xf32>
      %18 = vector.shape_cast %17 : vector<1x256x64xf32> to vector<256x64xf32>
      %c0_9 = arith.constant 0 : index
      %c0_10 = arith.constant 0 : index
      %19 = vector.load %arg13[%c0_9, %c0_10] : memref<256x1xf32, #tpu.memory_space<vmem>>, vector<256x1xf32>
      %20 = vector.broadcast %19 : vector<256x1xf32> to vector<256x64xf32>
      %21 = arith.mulf %18, %20 : vector<256x64xf32>
      %c0_11 = arith.constant 0 : index
      %c0_12 = arith.constant 0 : index
      %22 = vector.load %arg14[%c0_11, %c0_12] : memref<256x1xf32, #tpu.memory_space<vmem>>, vector<256x1xf32>
      %23 = vector.broadcast %22 : vector<256x1xf32> to vector<256x64xf32>
      %24 = arith.addf %21, %23 : vector<256x64xf32>
      %c0_13 = arith.constant 0 : index
      %c0_14 = arith.constant 0 : index
      %c0_15 = arith.constant 0 : index
      %25 = vector.load %arg7[%c0_13, %c0_14, %c0_15] : memref<1x256x64xf32, #tpu.memory_space<vmem>>, vector<1x256x64xf32>
      %26 = vector.shape_cast %25 : vector<1x256x64xf32> to vector<256x64xf32>
      %27 = arith.addf %24, %26 : vector<256x64xf32>
      %cst = arith.constant 0.000000e+00 : f32
      %28 = vector.broadcast %cst : f32 to vector<256x64xf32>
      %29 = arith.maximumf %27, %28 : vector<256x64xf32>
      %30 = arith.truncf %29 : vector<256x64xf32> to vector<256x64xbf16>
      %c0_16 = arith.constant 0 : index
      %c0_17 = arith.constant 0 : index
      %31 = vector.load %arg8[%c0_16, %c0_17] : memref<64x256xf32, #tpu.memory_space<vmem>>, vector<64x256xf32>
      %32 = arith.truncf %31 : vector<64x256xf32> to vector<64x256xbf16>
      %cst_18 = arith.constant dense<0.000000e+00> : vector<64x64xf32>
      %33 = tpu.matmul %32, %30, %cst_18 {dimension_numbers = #tpu.dot_dimension_numbers<[1], [0], [0], [1], [0, 0, 1, 1], [], []>} : vector<64x256xbf16>, vector<256x64xbf16>, vector<64x64xf32> -> vector<64x64xf32>
      %c0_19 = arith.constant 0 : index
      %c0_20 = arith.constant 0 : index
      %c0_21 = arith.constant 0 : index
      %34 = vector.load %arg9[%c0_19, %c0_20, %c0_21] : memref<1x64x64xf32, #tpu.memory_space<vmem>>, vector<1x64x64xf32>
      %35 = vector.shape_cast %34 : vector<1x64x64xf32> to vector<64x64xf32>
      %36 = vector.shape_cast %33 : vector<64x64xf32> to vector<1x64x64xf32>
      tpu.vector_store %arg9[%c0_19, %c0_20, %c0_21], %36 {strides = array<i32>} : memref<1x64x64xf32, #tpu.memory_space<vmem>>, vector<1x64x64xf32>,
    } else {
    }
    return
  }
  func.func @transform_0(%arg0: i32, %arg1: i32) -> (i32, i32, i32) {
    %c1_i32 = arith.constant 1 : i32
    %0 = arith.subi %c1_i32, %arg0 : i32
    %1 = arith.muli %arg1, %0 : i32
    %c1_i32_0 = arith.constant 1 : i32
    %2 = arith.muli %c1_i32_0, %arg0 : i32
    %3 = arith.addi %1, %2 : i32
    %c0_i32 = arith.constant 0 : i32
    %c0_i32_1 = arith.constant 0 : i32
    %c0_i32_2 = arith.constant 0 : i32
    return %3, %c0_i32, %c0_i32_1 : i32, i32, i32
  }
  func.func @transform_1(%arg0: i32, %arg1: i32) -> (i32, i32) {
    %c0_i32 = arith.constant 0 : i32
    %c0_i32_0 = arith.constant 0 : i32
    %c0_i32_1 = arith.constant 0 : i32
    return %c0_i32, %c0_i32_0 : i32, i32
  }
  func.func @transform_2(%arg0: i32, %arg1: i32) -> (i32, i32) {
    %c0_i32 = arith.constant 0 : i32
    %c0_i32_0 = arith.constant 0 : i32
    %c0_i32_1 = arith.constant 0 : i32
    return %c0_i32, %c0_i32_0 : i32, i32
  }
  func.func @transform_3(%arg0: i32, %arg1: i32) -> (i32, i32) {
    %c0_i32 = arith.constant 0 : i32
    %c0_i32_0 = arith.constant 0 : i32
    %c0_i32_1 = arith.constant 0 : i32
    return %c0_i32, %c0_i32_0 : i32, i32
  }
  func.func @transform_4(%arg0: i32, %arg1: i32) -> (i32, i32) {
    %c0_i32 = arith.constant 0 : i32
    %c0_i32_0 = arith.constant 0 : i32
    %c0_i32_1 = arith.constant 0 : i32
    return %c0_i32, %c0_i32_0 : i32, i32
  }
  func.func @transform_5(%arg0: i32, %arg1: i32) -> (i32, i32, i32) {
    %0 = arith.muli %arg1, %arg0 : i32
    %c0_i32 = arith.constant 0 : i32
    %c0_i32_0 = arith.constant 0 : i32
    %c0_i32_1 = arith.constant 0 : i32
    return %0, %c0_i32, %c0_i32_0 : i32, i32, i32
  }
  func.func @transform_6(%arg0: i32, %arg1: i32) -> (i32, i32) {
    %c0_i32 = arith.constant 0 : i32
    %c0_i32_0 = arith.constant 0 : i32
    %c0_i32_1 = arith.constant 0 : i32
    return %c0_i32, %c0_i32_0 : i32, i32
  }
  func.func @transform_7(%arg0: i32, %arg1: i32) -> (i32, i32, i32) {
    %0 = arith.muli %arg1, %arg0 : i32
    %c0_i32 = arith.constant 0 : i32
    %c0_i32_0 = arith.constant 0 : i32
    %c0_i32_1 = arith.constant 0 : i32
    return %0, %c0_i32, %c0_i32_0 : i32, i32, i32
  }
}

</mosaic_0001>

<llo_original>
// kernel: model_forward.1
$region0: #{model_forward.1}
  #allocation0 [shape = 'u32[]', space=smem, size = 0x4, offset = 0x4, fixed_abs, tag = 'smem constant byte address 0x4 - core index']
  #allocation1 [shape = 'u32[144,128]{1,0:T(1,128)}', space=vmem, size = 0x12000, scoped, tag = 'internal scratch']
  #allocation2 [shape = 'f32[2,256,64]{2,1,0:T(8,128)}', space=vmem, size = 0x40000, scoped, tag = 'scratch operand']
  #allocation3 [shape = 'f32[256,1]{1,0:T(8,128)}', space=vmem, size = 0x20000, scoped, tag = 'scratch operand']
  #allocation4 [shape = 'f32[256,1]{1,0:T(8,128)}', space=vmem, size = 0x20000, scoped, tag = 'scratch operand']
  #allocation5 [shape = 'f32[256,1]{1,0:T(8,128)}', space=vmem, size = 0x20000, scoped, tag = 'scratch operand']
  #allocation6 [shape = 'f32[256,1]{1,0:T(8,128)}', space=vmem, size = 0x20000, scoped, tag = 'scratch operand']
  %s0 = inlined_call_operand.vmem [shape: f32[2,128,256], index: 0, kind: input, shape index: {}]
  %s1 = inlined_call_operand.vmem [shape: bf16[256,64], index: 1, kind: input, shape index: {}]
  %s2 = inlined_call_operand.vmem [shape: f32[256,128], index: 2, kind: input, shape index: {}]
  %s3 = inlined_call_operand.vmem [shape: f32[256,1], index: 3, kind: input, shape index: {}]
  %s4 = inlined_call_operand.vmem [shape: f32[256,1], index: 4, kind: input, shape index: {}]
  %s5 = inlined_call_operand.vmem [shape: f32[2,256,64], index: 5, kind: input, shape index: {}]
  %s6 = inlined_call_operand.vmem [shape: f32[64,256], index: 6, kind: input, shape index: {}]
  %s7 = inlined_call_operand.vmem [shape: f32[2,64,64], index: 7, kind: output, shape index: {}]
  %s8 = sld [smem:[#allocation0]]
  $region77: #{model_forward.1} parent=0
    _
  %s10 = ssub.s32 1, %s8
  %s11 = scalar_select 0, %s10, %s8
  loop: start=0, step=1, limit=6
  $region2: #{model_forward.1} parent=0 // loop_pre_header
    _
  $region3: #{model_forward.1} parent=0 // loop_header
    %s13 = sphi 0, %s17
    %p14 = scmp.ge.s32.totalorder %s13, 6
    %s20 = sphi 0, %s32
    %s21 = sphi 0, %s28
    %s22 = sphi 0, %s20
    %s23 = sphi 0, %s21
    %s24 = sphi 0, %s22
    %s25 = sphi 0, %s23
    %s41 = sphi 0, %s43
    %s44 = sphi 0, %s41
    %s45 = sphi 0, %s44
    %s61 = sphi 0, %s45
    %s65 = sphi 0, %s65
    %s67 = sphi 0, %s65
    %s68 = sphi 0, %s67
    %s82 = sphi 0, %s68
    %s86 = sphi 0, %s86
    %s88 = sphi 0, %s86
    %s89 = sphi 0, %s88
    %s103 = sphi 0, %s89
    %s107 = sphi 0, %s107
    %s109 = sphi 0, %s107
    %s110 = sphi 0, %s109
    %s124 = sphi 0, %s110
    %s128 = sphi 0, %s128
    %s130 = sphi 0, %s128
    %s131 = sphi 0, %s130
    %s145 = sphi 0, %s131
    %s153 = sphi 0, %s155
    %s156 = sphi 0, %s153
    %s157 = sphi 0, %s156
    %s173 = sphi 0, %s157
    %s177 = sphi 0, %s177
    %s179 = sphi 0, %s177
    %s180 = sphi 0, %s179
    %s194 = sphi 0, %s180
    %s202 = sphi 0, %s204
    %s205 = sphi 0, %s202
    %s206 = sphi 0, %s205
    %s222 = sphi 0, %s206
  $region4: #{model_forward.1} parent=0 // loop_header_branch
    %16 = sbr.rel (%p14) target = $region8
  $region5: #{model_forward.1} parent=0 // loop_body
    %s18 = ssub.s32 %s13, 1
    %s19 = ssub.s32 %s13, 2
    %s26 = sadd.s32 1, %s21
    %p27 = scmp.ge.s32.totalorder %s26, 2
    %s28 = scalar_select %p27, 0, %s26
    %s29 = sadd.s32 1, %s20
    %s30 = scalar_select %p27, %s29, %s20
    %p31 = scmp.ge.s32.totalorder %s30, 2
    %s32 = scalar_select %p31, 0, %s30
    %s33 = ssub.s32 1, %s20
    %s34 = smul.u32 %s21, %s33
    %s35 = sadd.s32 %s34, %s20
    %s36 = ssub.s32 1, %s32
    %s37 = smul.u32 %s28, %s36
    %s38 = sadd.s32 %s37, %s32
    %s39 = ssub.s32 %s35, %s38
    %p40 = scmp.eq.s32.totalorder %s39, 0
    %s42 = sadd.s32 %s41, 1
    %s43 = scalar_select %p40, %s41, %s42
    %p46 = pneg %p40
    %p47 = scmp.eq.s32.totalorder %s13, 3
    %p48 = por %p46, %p47
    %p49 = scmp.ne.s32.totalorder %s41, %s44
    %p50 = scmp.eq.s32.totalorder %s13, 0
    %p51 = por %p49, %p50
    %p52 = scmp.ne.s32.totalorder %s41, %s44
    %p53 = scmp.eq.s32.totalorder %s18, 3
    %p54 = por %p52, %p53
    %p55 = scmp.ne.s32.totalorder %s44, %s45
    %p56 = scmp.eq.s32.totalorder %s18, 0
    %p57 = por %p55, %p56
    %p58 = scmp.ne.s32.totalorder %s44, %s45
    %p59 = scmp.eq.s32.totalorder %s19, 3
    %p60 = por %p58, %p59
    %p62 = scmp.ne.s32.totalorder %s45, %s61
    %p63 = scmp.eq.s32.totalorder %s19, 0
    %p64 = por %p62, %p63
    %s66 = sadd.s32 %s65, 1
    %p69 = scmp.eq.s32.totalorder %s13, 3
    %p70 = scmp.ne.s32.totalorder %s65, %s67
    %p71 = scmp.eq.s32.totalorder %s13, 0
    %p72 = por %p70, %p71
    %p73 = scmp.ne.s32.totalorder %s65, %s67
    %p74 = scmp.eq.s32.totalorder %s18, 3
    %p75 = por %p73, %p74
    %p76 = scmp.ne.s32.totalorder %s67, %s68
    %p77 = scmp.eq.s32.totalorder %s18, 0
    %p78 = por %p76, %p77
    %p79 = scmp.ne.s32.totalorder %s67, %s68
    %p80 = scmp.eq.s32.totalorder %s19, 3
    %p81 = por %p79, %p80
    %p83 = scmp.ne.s32.totalorder %s68, %s82
    %p84 = scmp.eq.s32.totalorder %s19, 0
    %p85 = por %p83, %p84
    %s87 = sadd.s32 %s86, 1
    %p90 = scmp.eq.s32.totalorder %s13, 3
    %p91 = scmp.ne.s32.totalorder %s86, %s88
    %p92 = scmp.eq.s32.totalorder %s13, 0
    %p93 = por %p91, %p92
    %p94 = scmp.ne.s32.totalorder %s86, %s88
    %p95 = scmp.eq.s32.totalorder %s18, 3
    %p96 = por %p94, %p95
    %p97 = scmp.ne.s32.totalorder %s88, %s89
    %p98 = scmp.eq.s32.totalorder %s18, 0
    %p99 = por %p97, %p98
    %p100 = scmp.ne.s32.totalorder %s88, %s89
    %p101 = scmp.eq.s32.totalorder %s19, 3
    %p102 = por %p100, %p101
    %p104 = scmp.ne.s32.totalorder %s89, %s103
    %p105 = scmp.eq.s32.totalorder %s19, 0
    %p106 = por %p104, %p105
    %s108 = sadd.s32 %s107, 1
    %p111 = scmp.eq.s32.totalorder %s13, 3
    %p112 = scmp.ne.s32.totalorder %s107, %s109
    %p113 = scmp.eq.s32.totalorder %s13, 0
    %p114 = por %p112, %p113
    %p115 = scmp.ne.s32.totalorder %s107, %s109
    %p116 = scmp.eq.s32.totalorder %s18, 3
    %p117 = por %p115, %p116
    %p118 = scmp.ne.s32.totalorder %s109, %s110
    %p119 = scmp.eq.s32.totalorder %s18, 0
    %p120 = por %p118, %p119
    %p121 = scmp.ne.s32.totalorder %s109, %s110
    %p122 = scmp.eq.s32.totalorder %s19, 3
    %p123 = por %p121, %p122
    %p125 = scmp.ne.s32.totalorder %s110, %s124
    %p126 = scmp.eq.s32.totalorder %s19, 0
    %p127 = por %p125, %p126
    %s129 = sadd.s32 %s128, 1
    %p132 = scmp.eq.s32.totalorder %s13, 3
    %p133 = scmp.ne.s32.totalorder %s128, %s130
    %p134 = scmp.eq.s32.totalorder %s13, 0
    %p135 = por %p133, %p134
    %p136 = scmp.ne.s32.totalorder %s128, %s130
    %p137 = scmp.eq.s32.totalorder %s18, 3
    %p138 = por %p136, %p137
    %p139 = scmp.ne.s32.totalorder %s130, %s131
    %p140 = scmp.eq.s32.totalorder %s18, 0
    %p141 = por %p139, %p140
    %p142 = scmp.ne.s32.totalorder %s130, %s131
    %p143 = scmp.eq.s32.totalorder %s19, 3
    %p144 = por %p142, %p143
    %p146 = scmp.ne.s32.totalorder %s131, %s145
    %p147 = scmp.eq.s32.totalorder %s19, 0
    %p148 = por %p146, %p147
    %s149 = smul.u32 %s21, %s20
    %s150 = smul.u32 %s28, %s32
    %s151 = ssub.s32 %s149, %s150
    %p152 = scmp.eq.s32.totalorder %s151, 0
    %s154 = sadd.s32 %s153, 1
    %s155 = scalar_select %p152, %s153, %s154
    %p158 = pneg %p152
    %p159 = scmp.eq.s32.totalorder %s13, 3
    %p160 = por %p158, %p159
    %p161 = scmp.ne.s32.totalorder %s153, %s156
    %p162 = scmp.eq.s32.totalorder %s13, 0
    %p163 = por %p161, %p162
    %p164 = scmp.ne.s32.totalorder %s153, %s156
    %p165 = scmp.eq.s32.totalorder %s18, 3
    %p166 = por %p164, %p165
    %p167 = scmp.ne.s32.totalorder %s156, %s157
    %p168 = scmp.eq.s32.totalorder %s18, 0
    %p169 = por %p167, %p168
    %p170 = scmp.ne.s32.totalorder %s156, %s157
    %p171 = scmp.eq.s32.totalorder %s19, 3
    %p172 = por %p170, %p171
    %p174 = scmp.ne.s32.totalorder %s157, %s173
    %p175 = scmp.eq.s32.totalorder %s19, 0
    %p176 = por %p174, %p175
    %s178 = sadd.s32 %s177, 1
    %p181 = scmp.eq.s32.totalorder %s13, 3
    %p182 = scmp.ne.s32.totalorder %s177, %s179
    %p183 = scmp.eq.s32.totalorder %s13, 0
    %p184 = por %p182, %p183
    %p185 = scmp.ne.s32.totalorder %s177, %s179
    %p186 = scmp.eq.s32.totalorder %s18, 3
    %p187 = por %p185, %p186
    %p188 = scmp.ne.s32.totalorder %s179, %s180
    %p189 = scmp.eq.s32.totalorder %s18, 0
    %p190 = por %p188, %p189
    %p191 = scmp.ne.s32.totalorder %s179, %s180
    %p192 = scmp.eq.s32.totalorder %s19, 3
    %p193 = por %p191, %p192
    %p195 = scmp.ne.s32.totalorder %s180, %s194
    %p196 = scmp.eq.s32.totalorder %s19, 0
    %p197 = por %p195, %p196
    %s198 = smul.u32 %s21, %s20
    %s199 = smul.u32 %s28, %s32
    %s200 = ssub.s32 %s198, %s199
    %p201 = scmp.eq.s32.totalorder %s200, 0
    %s203 = sadd.s32 %s202, 1
    %s204 = scalar_select %p201, %s202, %s203
    %p207 = pneg %p201
    %p208 = scmp.eq.s32.totalorder %s13, 3
    %p209 = por %p207, %p208
    %p210 = scmp.ne.s32.totalorder %s202, %s205
    %p211 = scmp.eq.s32.totalorder %s13, 0
    %p212 = por %p210, %p211
    %p213 = scmp.ne.s32.totalorder %s202, %s205
    %p214 = scmp.eq.s32.totalorder %s18, 3
    %p215 = por %p213, %p214
    %p216 = scmp.ne.s32.totalorder %s205, %s206
    %p217 = scmp.eq.s32.totalorder %s18, 0
    %p218 = por %p216, %p217
    %p219 = scmp.ne.s32.totalorder %s205, %s206
    %p220 = scmp.eq.s32.totalorder %s19, 3
    %p221 = por %p219, %p220
    %p223 = scmp.ne.s32.totalorder %s206, %s222
    %p224 = scmp.eq.s32.totalorder %s19, 0
    %p225 = por %p223, %p224
    %p226 = scmp.le.s32.totalorder 1, %s13
    %p227 = scmp.lt.s32.totalorder %s13, 5
    %p228 = pnand %p226, %p227
    %p229 = pneg %p228
    // Predicated region
    $region9: #{model_forward.1} parent=5 // pred_check
      _
    $region10: #{model_forward.1} parent=5 // pred_check_branch
      %231 = sbr.rel (%p228) target = $region12
    $region11: #{model_forward.1} parent=5 // pred_region
      %s232 = ssub.s32 %s13, 1
      // Predicated region
      $region13: #{model_forward.1} parent=11 // pred_check
        %p233 = pneg %p78
      $region14: #{model_forward.1} parent=11 // pred_check_branch
        %235 = sbr.rel (%p233) target = $region16
      $region15: #{model_forward.1} parent=11 // pred_region
        _
      $region16: #{model_forward.1} parent=11 // pred_fallthru
        _
      // Predicated region
      $region17: #{model_forward.1} parent=11 // pred_check
        %p236 = pneg %p99
      $region18: #{model_forward.1} parent=11 // pred_check_branch
        %238 = sbr.rel (%p236) target = $region20
      $region19: #{model_forward.1} parent=11 // pred_region
        _
      $region20: #{model_forward.1} parent=11 // pred_fallthru
        _
      // Predicated region
      $region21: #{model_forward.1} parent=11 // pred_check
        %p239 = pneg %p120
      $region22: #{model_forward.1} parent=11 // pred_check_branch
        %241 = sbr.rel (%p239) target = $region24
      $region23: #{model_forward.1} parent=11 // pred_region
        _
      $region24: #{model_forward.1} parent=11 // pred_fallthru
        _
      // Predicated region
      $region25: #{model_forward.1} parent=11 // pred_check
        %p242 = pneg %p141
      $region26: #{model_forward.1} parent=11 // pred_check_branch
        %244 = sbr.rel (%p242) target = $region28
      $region27: #{model_forward.1} parent=11 // pred_region
        _
      $region28: #{model_forward.1} parent=11 // pred_fallthru
        _
      // Predicated region
      $region29: #{model_forward.1} parent=11 // pred_check
        %p245 = pneg %p190
      $region30: #{model_forward.1} parent=11 // pred_check_branch
        %247 = sbr.rel (%p245) target = $region32
      $region31: #{model_forward.1} parent=11 // pred_region
        _
      $region32: #{model_forward.1} parent=11 // pred_fallthru
        _
    $region12: #{model_forward.1} parent=5 // pred_fallthru
      _
    %p248 = scmp.lt.s32.totalorder %s13, 4
    // Predicated region
    $region33: #{model_forward.1} parent=5 // pred_check
      %p249 = pneg %p248
    $region34: #{model_forward.1} parent=5 // pred_check_branch
      %251 = sbr.rel (%p249) target = $region36
    $region35: #{model_forward.1} parent=5 // pred_region
      // Predicated region
      $region37: #{model_forward.1} parent=35 // pred_check
        %p252 = pneg %p51
      $region38: #{model_forward.1} parent=35 // pred_check_branch
        %254 = sbr.rel (%p252) target = $region40
      $region39: #{model_forward.1} parent=35 // pred_region
        %s255 = ssub.s32 1, %s20
        %s256 = smul.u32 %s21, %s255
        %s257 = sadd.s32 %s256, %s20
        %p258 = scmp.lt.s32.totalorder %s257, 1
        %s259 = scalar_select %p258, %s257, 1
        %s260 = smul.addr %s259, 32
        %s261 = smul.addr %s260, 8
        %s262 = scalar_lea.vmem %s0, %s261
        %s263 = ssub.s32 1, %s20
        %s264 = smul.u32 %s21, %s263
        %s265 = sadd.s32 %s264, %s20
      $region40: #{model_forward.1} parent=35 // pred_fallthru
        _
      // Predicated region
      $region41: #{model_forward.1} parent=35 // pred_check
        %p266 = pneg %p163
      $region42: #{model_forward.1} parent=35 // pred_check_branch
        %268 = sbr.rel (%p266) target = $region44
      $region43: #{model_forward.1} parent=35 // pred_region
        %s269 = smul.u32 %s21, %s20
        %p270 = scmp.lt.s32.totalorder %s269, 1
        %s271 = scalar_select %p270, %s269, 1
        %s272 = smul.addr %s271, 32
        %s273 = smul.addr %s272, 8
        %s274 = scalar_lea.vmem %s5, %s273
        %s275 = smul.u32 %s21, %s20
      $region44: #{model_forward.1} parent=35 // pred_fallthru
        _
    $region36: #{model_forward.1} parent=5 // pred_fallthru
      _
    %p276 = scmp.le.s32.totalorder 1, %s13
    %p277 = scmp.lt.s32.totalorder %s13, 5
    %p278 = pnand %p276, %p277
    %p279 = pneg %p278
    // Predicated region
    $region45: #{model_forward.1} parent=5 // pred_check
      _
    $region46: #{model_forward.1} parent=5 // pred_check_branch
      %281 = sbr.rel (%p278) target = $region48
    $region47: #{model_forward.1} parent=5 // pred_region
      %s282 = ssub.s32 %s13, 1
      %s283 = ssub.s32 1, %s22
      %s284 = smul.u32 %s23, %s283
      %s285 = sadd.s32 %s284, %s22
      %p286 = scmp.lt.s32.totalorder %s285, 1
      %s287 = scalar_select %p286, %s285, 1
      %s288 = smul.addr %s287, 32
      %s289 = smul.addr %s288, 8
      %s290 = scalar_lea.vmem %s0, %s289
      %p291 = pneg %p57
      %p292 = pneg %p54
      %p293 = pneg %p78
      %p294 = pneg %p75
      %p295 = pneg %p99
      %p296 = pneg %p96
      %p297 = pneg %p120
      %p298 = pneg %p117
      %p299 = pneg %p141
      %p300 = pneg %p138
      %s301 = smul.u32 %s23, %s22
      %p302 = scmp.lt.s32.totalorder %s301, 1
      %s303 = scalar_select %p302, %s301, 1
      %s304 = smul.addr %s303, 32
      %s305 = smul.addr %s304, 8
      %s306 = scalar_lea.vmem %s5, %s305
      %p307 = pneg %p169
      %p308 = pneg %p166
      %p309 = pneg %p190
      %p310 = pneg %p187
      %p311 = pneg %p218
      %p312 = pneg %p215
      %s313 = smul.u32 %s23, %s22
      %p314 = scmp.lt.s32.totalorder %s313, 1
      %s315 = scalar_select %p314, %s313, 1
      %s316 = smul.addr %s315, 8
      %s317 = smul.addr %s316, 8
      %s318 = scalar_lea.vmem %s7, %s317
      %s319 = ssub.s32 1, %s22
      %s320 = smul.u32 %s23, %s319
      %s321 = sadd.s32 %s320, %s22
      %p322 = scmp.lt.s32.totalorder %s321, 1
      %s323 = scalar_select %p322, %s321, 1
      %s324 = smul.addr %s323, 32
      %s325 = smul.addr %s324, 8
      %s326 = scalar_lea.vmem %s0, %s325
      %s327 = ssub.s32 1, %s22
      %s328 = smul.u32 %s23, %s327
      %s329 = sadd.s32 %s328, %s22
      %s330 = smul.u32 %s23, %s22
      %p331 = scmp.lt.s32.totalorder %s330, 1
      %s332 = scalar_select %p331, %s330, 1
      %s333 = smul.addr %s332, 32
      %s334 = smul.addr %s333, 8
      %s335 = scalar_lea.vmem %s5, %s334
      %s336 = smul.u32 %s23, %s22
      %s337 = smul.u32 %s23, %s22
      %p338 = scmp.lt.s32.totalorder %s337, 1
      %s339 = scalar_select %p338, %s337, 1
      %s340 = smul.addr %s339, 8
      %s341 = smul.addr %s340, 8
      %s342 = scalar_lea.vmem %s7, %s341
      %s343 = smul.u32 %s23, %s22
      %p345 = scmp.eq.s32.totalorder %s22, 0
      %p346 = scmp.eq.s32.totalorder %s23, 0
      %p347 = pnand %p345, %p346
      %p348 = pneg %p347
      // Predicated region
      $region49: #{model_forward.1} parent=47 // pred_check
        _
      $region50: #{model_forward.1} parent=47 // pred_check_branch
        %350 = sbr.rel (%p347) target = $region52
      $region51: #{model_forward.1} parent=47 // pred_region
        %vm351 = vcmask 7168
        %352 = vst.msk [vmem:[#allocation3] sm:$0xff] %vm351, 0.0
        %353 = vst.msk [vmem:[#allocation3 + $0x8] sm:$0xff] %vm351, 0.0
        %354 = vst.msk [vmem:[#allocation3 + $0x10] sm:$0xff] %vm351, 0.0
        %355 = vst.msk [vmem:[#allocation3 + $0x18] sm:$0xff] %vm351, 0.0
        %356 = vst.msk [vmem:[#allocation3 + $0x20] sm:$0xff] %vm351, 0.0
        %357 = vst.msk [vmem:[#allocation3 + $0x28] sm:$0xff] %vm351, 0.0
        %358 = vst.msk [vmem:[#allocation3 + $0x30] sm:$0xff] %vm351, 0.0
        %359 = vst.msk [vmem:[#allocation3 + $0x38] sm:$0xff] %vm351, 0.0
        %360 = vst.msk [vmem:[#allocation3 + $0x40] sm:$0xff] %vm351, 0.0
        %361 = vst.msk [vmem:[#allocation3 + $0x48] sm:$0xff] %vm351, 0.0
        %362 = vst.msk [vmem:[#allocation3 + $0x50] sm:$0xff] %vm351, 0.0
        %363 = vst.msk [vmem:[#allocation3 + $0x58] sm:$0xff] %vm351, 0.0
        %364 = vst.msk [vmem:[#allocation3 + $0x60] sm:$0xff] %vm351, 0.0
        %365 = vst.msk [vmem:[#allocation3 + $0x68] sm:$0xff] %vm351, 0.0
        %366 = vst.msk [vmem:[#allocation3 + $0x70] sm:$0xff] %vm351, 0.0
        %367 = vst.msk [vmem:[#allocation3 + $0x78] sm:$0xff] %vm351, 0.0
        %368 = vst.msk [vmem:[#allocation3 + $0x80] sm:$0xff] %vm351, 0.0
        %369 = vst.msk [vmem:[#allocation3 + $0x88] sm:$0xff] %vm351, 0.0
        %370 = vst.msk [vmem:[#allocation3 + $0x90] sm:$0xff] %vm351, 0.0
        %371 = vst.msk [vmem:[#allocation3 + $0x98] sm:$0xff] %vm351, 0.0
        %372 = vst.msk [vmem:[#allocation3 + $0xa0] sm:$0xff] %vm351, 0.0
        %373 = vst.msk [vmem:[#allocation3 + $0xa8] sm:$0xff] %vm351, 0.0
        %374 = vst.msk [vmem:[#allocation3 + $0xb0] sm:$0xff] %vm351, 0.0
        %375 = vst.msk [vmem:[#allocation3 + $0xb8] sm:$0xff] %vm351, 0.0
        %376 = vst.msk [vmem:[#allocation3 + $0xc0] sm:$0xff] %vm351, 0.0
        %377 = vst.msk [vmem:[#allocation3 + $0xc8] sm:$0xff] %vm351, 0.0
        %378 = vst.msk [vmem:[#allocation3 + $0xd0] sm:$0xff] %vm351, 0.0
        %379 = vst.msk [vmem:[#allocation3 + $0xd8] sm:$0xff] %vm351, 0.0
        %380 = vst.msk [vmem:[#allocation3 + $0xe0] sm:$0xff] %vm351, 0.0
        %381 = vst.msk [vmem:[#allocation3 + $0xe8] sm:$0xff] %vm351, 0.0
        %382 = vst.msk [vmem:[#allocation3 + $0xf0] sm:$0xff] %vm351, 0.0
        %383 = vst.msk [vmem:[#allocation3 + $0xf8] sm:$0xff] %vm351, 0.0
        %384 = vst.msk [vmem:[#allocation4] sm:$0xff] %vm351, 0.0
        %385 = vst.msk [vmem:[#allocation4 + $0x8] sm:$0xff] %vm351, 0.0
        %386 = vst.msk [vmem:[#allocation4 + $0x10] sm:$0xff] %vm351, 0.0
        %387 = vst.msk [vmem:[#allocation4 + $0x18] sm:$0xff] %vm351, 0.0
        %388 = vst.msk [vmem:[#allocation4 + $0x20] sm:$0xff] %vm351, 0.0
        %389 = vst.msk [vmem:[#allocation4 + $0x28] sm:$0xff] %vm351, 0.0
        %390 = vst.msk [vmem:[#allocation4 + $0x30] sm:$0xff] %vm351, 0.0
        %391 = vst.msk [vmem:[#allocation4 + $0x38] sm:$0xff] %vm351, 0.0
        %392 = vst.msk [vmem:[#allocation4 + $0x40] sm:$0xff] %vm351, 0.0
        %393 = vst.msk [vmem:[#allocation4 + $0x48] sm:$0xff] %vm351, 0.0
        %394 = vst.msk [vmem:[#allocation4 + $0x50] sm:$0xff] %vm351, 0.0
        %395 = vst.msk [vmem:[#allocation4 + $0x58] sm:$0xff] %vm351, 0.0
        %396 = vst.msk [vmem:[#allocation4 + $0x60] sm:$0xff] %vm351, 0.0
        %397 = vst.msk [vmem:[#allocation4 + $0x68] sm:$0xff] %vm351, 0.0
        %398 = vst.msk [vmem:[#allocation4 + $0x70] sm:$0xff] %vm351, 0.0
        %399 = vst.msk [vmem:[#allocation4 + $0x78] sm:$0xff] %vm351, 0.0
        %400 = vst.msk [vmem:[#allocation4 + $0x80] sm:$0xff] %vm351, 0.0
        %401 = vst.msk [vmem:[#allocation4 + $0x88] sm:$0xff] %vm351, 0.0
        %402 = vst.msk [vmem:[#allocation4 + $0x90] sm:$0xff] %vm351, 0.0
        %403 = vst.msk [vmem:[#allocation4 + $0x98] sm:$0xff] %vm351, 0.0
        %404 = vst.msk [vmem:[#allocation4 + $0xa0] sm:$0xff] %vm351, 0.0
        %405 = vst.msk [vmem:[#allocation4 + $0xa8] sm:$0xff] %vm351, 0.0
        %406 = vst.msk [vmem:[#allocation4 + $0xb0] sm:$0xff] %vm351, 0.0
        %407 = vst.msk [vmem:[#allocation4 + $0xb8] sm:$0xff] %vm351, 0.0
        %408 = vst.msk [vmem:[#allocation4 + $0xc0] sm:$0xff] %vm351, 0.0
        %409 = vst.msk [vmem:[#allocation4 + $0xc8] sm:$0xff] %vm351, 0.0
        %410 = vst.msk [vmem:[#allocation4 + $0xd0] sm:$0xff] %vm351, 0.0
        %411 = vst.msk [vmem:[#allocation4 + $0xd8] sm:$0xff] %vm351, 0.0
        %412 = vst.msk [vmem:[#allocation4 + $0xe0] sm:$0xff] %vm351, 0.0
        %413 = vst.msk [vmem:[#allocation4 + $0xe8] sm:$0xff] %vm351, 0.0
        %414 = vst.msk [vmem:[#allocation4 + $0xf0] sm:$0xff] %vm351, 0.0
        %415 = vst.msk [vmem:[#allocation4 + $0xf8] sm:$0xff] %vm351, 0.0
      $region52: #{model_forward.1} parent=47 // pred_fallthru
        _
      // Predicated region
      $region53: #{model_forward.1} parent=47 // pred_check
        %p416 = pneg %p345
      $region54: #{model_forward.1} parent=47 // pred_check_branch
        %418 = sbr.rel (%p416) target = $region56
      $region55: #{model_forward.1} parent=47 // pred_region
        %v419 = vld [vmem:[%s326] sm:$0xff]
        %v420 = vld [vmem:[%s326 + $0x8] sm:$0xff]
        %v421 = vld [vmem:[%s326 + $0x10] sm:$0xff]
        %v422 = vld [vmem:[%s326 + $0x18] sm:$0xff]
        %v423 = vld [vmem:[%s326 + $0x20] sm:$0xff]
        %v424 = vld [vmem:[%s326 + $0x28] sm:$0xff]
        %v425 = vld [vmem:[%s326 + $0x30] sm:$0xff]
        %v426 = vld [vmem:[%s326 + $0x38] sm:$0xff]
        %v427 = vld [vmem:[%s326 + $0x40] sm:$0xff]
        %v428 = vld [vmem:[%s326 + $0x48] sm:$0xff]
        %v429 = vld [vmem:[%s326 + $0x50] sm:$0xff]
        %v430 = vld [vmem:[%s326 + $0x58] sm:$0xff]
        %v431 = vld [vmem:[%s326 + $0x60] sm:$0xff]
        %v432 = vld [vmem:[%s326 + $0x68] sm:$0xff]
        %v433 = vld [vmem:[%s326 + $0x70] sm:$0xff]
        %v434 = vld [vmem:[%s326 + $0x78] sm:$0xff]
        %v435 = vld [vmem:[%s326 + $0x80] sm:$0xff]
        %v436 = vld [vmem:[%s326 + $0x88] sm:$0xff]
        %v437 = vld [vmem:[%s326 + $0x90] sm:$0xff]
        %v438 = vld [vmem:[%s326 + $0x98] sm:$0xff]
        %v439 = vld [vmem:[%s326 + $0xa0] sm:$0xff]
        %v440 = vld [vmem:[%s326 + $0xa8] sm:$0xff]
        %v441 = vld [vmem:[%s326 + $0xb0] sm:$0xff]
        %v442 = vld [vmem:[%s326 + $0xb8] sm:$0xff]
        %v443 = vld [vmem:[%s326 + $0xc0] sm:$0xff]
        %v444 = vld [vmem:[%s326 + $0xc8] sm:$0xff]
        %v445 = vld [vmem:[%s326 + $0xd0] sm:$0xff]
        %v446 = vld [vmem:[%s326 + $0xd8] sm:$0xff]
        %v447 = vld [vmem:[%s326 + $0xe0] sm:$0xff]
        %v448 = vld [vmem:[%s326 + $0xe8] sm:$0xff]
        %v449 = vld [vmem:[%s326 + $0xf0] sm:$0xff]
        %v450 = vld [vmem:[%s326 + $0xf8] sm:$0xff]
        %v451 = vpack.c.bf16 %v421, %v419
        %v452 = vpack.c.bf16 %v422, %v420
        %v453 = vpack.c.bf16 %v425, %v423
        %v454 = vpack.c.bf16 %v426, %v424
        %v455 = vpack.c.bf16 %v429, %v427
        %v456 = vpack.c.bf16 %v430, %v428
        %v457 = vpack.c.bf16 %v433, %v431
        %v458 = vpack.c.bf16 %v434, %v432
        %v459 = vpack.c.bf16 %v437, %v435
        %v460 = vpack.c.bf16 %v438, %v436
        %v461 = vpack.c.bf16 %v441, %v439
        %v462 = vpack.c.bf16 %v442, %v440
        %v463 = vpack.c.bf16 %v445, %v443
        %v464 = vpack.c.bf16 %v446, %v444
        %v465 = vpack.c.bf16 %v449, %v447
        %v466 = vpack.c.bf16 %v450, %v448
        %v467 = vld [vmem:[%s1] sm:$0xf]
        %v468 = vld [vmem:[%s1 + $0x4] sm:$0xf]
        %v469 = vld [vmem:[%s1 + $0x8] sm:$0xf]
        %v470 = vld [vmem:[%s1 + $0xc] sm:$0xf]
        %v471 = vld [vmem:[%s1 + $0x10] sm:$0xf]
        %v472 = vld [vmem:[%s1 + $0x14] sm:$0xf]
        %v473 = vld [vmem:[%s1 + $0x18] sm:$0xf]
        %v474 = vld [vmem:[%s1 + $0x1c] sm:$0xf]
        %v475 = vld [vmem:[%s1 + $0x20] sm:$0xf]
        %v476 = vld [vmem:[%s1 + $0x24] sm:$0xf]
        %v477 = vld [vmem:[%s1 + $0x28] sm:$0xf]
        %v478 = vld [vmem:[%s1 + $0x2c] sm:$0xf]
        %v479 = vld [vmem:[%s1 + $0x30] sm:$0xf]
        %v480 = vld [vmem:[%s1 + $0x34] sm:$0xf]
        %v481 = vld [vmem:[%s1 + $0x38] sm:$0xf]
        %v482 = vld [vmem:[%s1 + $0x3c] sm:$0xf]
        %v483 = vld [vmem:[%s1 + $0x40] sm:$0xf]
        %v484 = vld [vmem:[%s1 + $0x44] sm:$0xf]
        %v485 = vld [vmem:[%s1 + $0x48] sm:$0xf]
        %v486 = vld [vmem:[%s1 + $0x4c] sm:$0xf]
        %v487 = vld [vmem:[%s1 + $0x50] sm:$0xf]
        %v488 = vld [vmem:[%s1 + $0x54] sm:$0xf]
        %v489 = vld [vmem:[%s1 + $0x58] sm:$0xf]
        %v490 = vld [vmem:[%s1 + $0x5c] sm:$0xf]
        %v491 = vld [vmem:[%s1 + $0x60] sm:$0xf]
        %v492 = vld [vmem:[%s1 + $0x64] sm:$0xf]
        %v493 = vld [vmem:[%s1 + $0x68] sm:$0xf]
        %v494 = vld [vmem:[%s1 + $0x6c] sm:$0xf]
        %v495 = vld [vmem:[%s1 + $0x70] sm:$0xf]
        %v496 = vld [vmem:[%s1 + $0x74] sm:$0xf]
        %v497 = vld [vmem:[%s1 + $0x78] sm:$0xf]
        %v498 = vld [vmem:[%s1 + $0x7c] sm:$0xf]
        %v531 = vunpack.c.l.b16 %v467
        %v532 = vunpack.c.l.b16 %v468
        %v533 = vunpack.c.l.b16 %v469
        %v534 = vunpack.c.l.b16 %v470
        %v535 = vunpack.c.l.b16 %v471
        %v536 = vunpack.c.l.b16 %v472
        %v537 = vunpack.c.l.b16 %v473
        %v538 = vunpack.c.l.b16 %v474
        %v539 = vunpack.c.l.b16 %v475
        %v540 = vunpack.c.l.b16 %v476
        %v541 = vunpack.c.l.b16 %v477
        %v542 = vunpack.c.l.b16 %v478
        %v543 = vunpack.c.l.b16 %v479
        %v544 = vunpack.c.l.b16 %v480
        %v545 = vunpack.c.l.b16 %v481
        %v546 = vunpack.c.l.b16 %v482
        %v547 = vunpack.c.l.b16 %v483
        %v548 = vunpack.c.l.b16 %v484
        %v549 = vunpack.c.l.b16 %v485
        %v550 = vunpack.c.l.b16 %v486
        %v551 = vunpack.c.l.b16 %v487
        %v552 = vunpack.c.l.b16 %v488
        %v553 = vunpack.c.l.b16 %v489
        %v554 = vunpack.c.l.b16 %v490
        %v555 = vunpack.c.l.b16 %v491
        %v556 = vunpack.c.l.b16 %v492
        %v557 = vunpack.c.l.b16 %v493
        %v558 = vunpack.c.l.b16 %v494
        %v559 = vunpack.c.l.b16 %v495
        %v560 = vunpack.c.l.b16 %v496
        %v561 = vunpack.c.l.b16 %v497
        %v562 = vunpack.c.l.b16 %v498
        %v563 = vpack.c.b16 %v532, %v531
        %v564 = vpack.c.b16 %v534, %v533
        %v565 = vpack.c.b16 %v536, %v535
        %v566 = vpack.c.b16 %v538, %v537
        %v567 = vpack.c.b16 %v540, %v539
        %v568 = vpack.c.b16 %v542, %v541
        %v569 = vpack.c.b16 %v544, %v543
        %v570 = vpack.c.b16 %v546, %v545
        %v571 = vpack.c.b16 %v548, %v547
        %v572 = vpack.c.b16 %v550, %v549
        %v573 = vpack.c.b16 %v552, %v551
        %v574 = vpack.c.b16 %v554, %v553
        %v575 = vpack.c.b16 %v556, %v555
        %v576 = vpack.c.b16 %v558, %v557
        %v577 = vpack.c.b16 %v560, %v559
        %v578 = vpack.c.b16 %v562, %v561
        %595 = vmatprep.subr.bf16.mxu0 0
        %596 = vmatpush1.bf16.msra.mxu0 %v563
        %597 = vmatprep.subr.bf16.mxu0 0
        %598 = vmatpush1.bf16.msra.mxu0 %v564
        %599 = vmatprep.subr.bf16.mxu0 0
        %600 = vmatpush1.bf16.msra.mxu0 %v565
        %601 = vmatprep.subr.bf16.mxu0 0
        %602 = vmatpush1.bf16.msra.mxu0 %v566
        %603 = vmatprep.subr.bf16.mxu0 0
        %604 = vmatpush1.bf16.msra.mxu0 %v567
        %605 = vmatprep.subr.bf16.mxu0 0
        %606 = vmatpush1.bf16.msra.mxu0 %v568
        %607 = vmatprep.subr.bf16.mxu0 0
        %608 = vmatpush1.bf16.msra.mxu0 %v569
        %609 = vmatprep.subr.bf16.mxu0 0
        %610 = vmatpush1.bf16.msra.mxu0 %v570
        %611 = vmatprep.subr.bf16.mxu0 0
        %612 = vmatpush1.bf16.msra.mxu0 %v571
        %613 = vmatprep.subr.bf16.mxu0 0
        %614 = vmatpush1.bf16.msra.mxu0 %v572
        %615 = vmatprep.subr.bf16.mxu0 0
        %616 = vmatpush1.bf16.msra.mxu0 %v573
        %617 = vmatprep.subr.bf16.mxu0 0
        %618 = vmatpush1.bf16.msra.mxu0 %v574
        %619 = vmatprep.subr.bf16.mxu0 0
        %620 = vmatpush1.bf16.msra.mxu0 %v575
        %621 = vmatprep.subr.bf16.mxu0 0
        %622 = vmatpush1.bf16.msra.mxu0 %v576
        %623 = vmatprep.subr.bf16.mxu0 0
        %624 = vmatpush1.bf16.msra.mxu0 %v577
        %625 = vmatprep.subr.bf16.mxu0 0
        %626 = vmatpush1.bf16.msra.mxu0 %v578
        %627 = vmatprep.mubr.bf16.mxu0 %v452
        %628 = vmatmul.mubr.bf16.gmra.mrb[0].mxu0 %v451
        %v629 = vpop.f32.mrb[0].mxu0
        %v630 = vadd.f32 0.0, %v629
        %v631 = vpop.f32.mrb[0].mxu0
        %v632 = vpop.f32.mrb[0].mxu0
        %v633 = vadd.f32 0.0, %v632
        %v634 = vpop.f32.mrb[0].mxu0
        %635 = vmatprep.mubr.bf16.mxu0 %v454
        %636 = vmatmul.mubr.bf16.gmra.mrb[0].mxu0 %v453
        %v637 = vpop.f32.mrb[0].mxu0
        %v638 = vadd.f32 0.0, %v637
        %v639 = vpop.f32.mrb[0].mxu0
        %v640 = vpop.f32.mrb[0].mxu0
        %v641 = vadd.f32 0.0, %v640
        %v642 = vpop.f32.mrb[0].mxu0
        %643 = vmatprep.mubr.bf16.mxu0 %v456
        %644 = vmatmul.mubr.bf16.gmra.mrb[0].mxu0 %v455
        %v645 = vpop.f32.mrb[0].mxu0
        %v646 = vadd.f32 0.0, %v645
        %v647 = vpop.f32.mrb[0].mxu0
        %v648 = vpop.f32.mrb[0].mxu0
        %v649 = vadd.f32 0.0, %v648
        %v650 = vpop.f32.mrb[0].mxu0
        %651 = vmatprep.mubr.bf16.mxu0 %v458
        %652 = vmatmul.mubr.bf16.gmra.mrb[0].mxu0 %v457
        %v653 = vpop.f32.mrb[0].mxu0
        %v654 = vadd.f32 0.0, %v653
        %v655 = vpop.f32.mrb[0].mxu0
        %v656 = vpop.f32.mrb[0].mxu0
        %v657 = vadd.f32 0.0, %v656
        %v658 = vpop.f32.mrb[0].mxu0
        %659 = vmatprep.mubr.bf16.mxu0 %v460
        %660 = vmatmul.mubr.bf16.gmra.mrb[0].mxu0 %v459
        %v661 = vpop.f32.mrb[0].mxu0
        %v662 = vadd.f32 0.0, %v661
        %v663 = vpop.f32.mrb[0].mxu0
        %v664 = vpop.f32.mrb[0].mxu0
        %v665 = vadd.f32 0.0, %v664
        %v666 = vpop.f32.mrb[0].mxu0
        %667 = vmatprep.mubr.bf16.mxu0 %v462
        %668 = vmatmul.mubr.bf16.gmra.mrb[0].mxu0 %v461
        %v669 = vpop.f32.mrb[0].mxu0
        %v670 = vadd.f32 0.0, %v669
        %v671 = vpop.f32.mrb[0].mxu0
        %v672 = vpop.f32.mrb[0].mxu0
        %v673 = vadd.f32 0.0, %v672
        %v674 = vpop.f32.mrb[0].mxu0
        %675 = vmatprep.mubr.bf16.mxu0 %v464
        %676 = vmatmul.mubr.bf16.gmra.mrb[0].mxu0 %v463
        %v677 = vpop.f32.mrb[0].mxu0
        %v678 = vadd.f32 0.0, %v677
        %v679 = vpop.f32.mrb[0].mxu0
        %v680 = vpop.f32.mrb[0].mxu0
        %v681 = vadd.f32 0.0, %v680
        %v682 = vpop.f32.mrb[0].mxu0
        %683 = vmatprep.mubr.bf16.mxu0 %v466
        %684 = vmatmul.mubr.bf16.gmra.mrb[0].mxu0 %v465
        %v685 = vpop.f32.mrb[0].mxu0
        %v686 = vadd.f32 0.0, %v685
        %v687 = vpop.f32.mrb[0].mxu0
        %v688 = vpop.f32.mrb[0].mxu0
        %v689 = vadd.f32 0.0, %v688
        %v690 = vpop.f32.mrb[0].mxu0
        %691 = vdwg.mxu0
        %v692 = vld [vmem:[%s2] sm:$0xff]
        %v693 = vld [vmem:[%s2 + $0x8] sm:$0xff]
        %v694 = vld [vmem:[%s2 + $0x10] sm:$0xff]
        %v695 = vld [vmem:[%s2 + $0x18] sm:$0xff]
        %v696 = vld [vmem:[%s2 + $0x20] sm:$0xff]
        %v697 = vld [vmem:[%s2 + $0x28] sm:$0xff]
        %v698 = vld [vmem:[%s2 + $0x30] sm:$0xff]
        %v699 = vld [vmem:[%s2 + $0x38] sm:$0xff]
        %v700 = vld [vmem:[%s2 + $0x40] sm:$0xff]
        %v701 = vld [vmem:[%s2 + $0x48] sm:$0xff]
        %v702 = vld [vmem:[%s2 + $0x50] sm:$0xff]
        %v703 = vld [vmem:[%s2 + $0x58] sm:$0xff]
        %v704 = vld [vmem:[%s2 + $0x60] sm:$0xff]
        %v705 = vld [vmem:[%s2 + $0x68] sm:$0xff]
        %v706 = vld [vmem:[%s2 + $0x70] sm:$0xff]
        %v707 = vld [vmem:[%s2 + $0x78] sm:$0xff]
        %v708 = vld [vmem:[%s2 + $0x80] sm:$0xff]
        %v709 = vld [vmem:[%s2 + $0x88] sm:$0xff]
        %v710 = vld [vmem:[%s2 + $0x90] sm:$0xff]
        %v711 = vld [vmem:[%s2 + $0x98] sm:$0xff]
        %v712 = vld [vmem:[%s2 + $0xa0] sm:$0xff]
        %v713 = vld [vmem:[%s2 + $0xa8] sm:$0xff]
        %v714 = vld [vmem:[%s2 + $0xb0] sm:$0xff]
        %v715 = vld [vmem:[%s2 + $0xb8] sm:$0xff]
        %v716 = vld [vmem:[%s2 + $0xc0] sm:$0xff]
        %v717 = vld [vmem:[%s2 + $0xc8] sm:$0xff]
        %v718 = vld [vmem:[%s2 + $0xd0] sm:$0xff]
        %v719 = vld [vmem:[%s2 + $0xd8] sm:$0xff]
        %v720 = vld [vmem:[%s2 + $0xe0] sm:$0xff]
        %v721 = vld [vmem:[%s2 + $0xe8] sm:$0xff]
        %v722 = vld [vmem:[%s2 + $0xf0] sm:$0xff]
        %v723 = vld [vmem:[%s2 + $0xf8] sm:$0xff]
        %v724 = vpack.c.bf16 %v693, %v692
        %v725 = vpack.c.bf16 %v695, %v694
        %v726 = vpack.c.bf16 %v697, %v696
        %v727 = vpack.c.bf16 %v699, %v698
        %v728 = vpack.c.bf16 %v701, %v700
        %v729 = vpack.c.bf16 %v703, %v702
        %v730 = vpack.c.bf16 %v705, %v704
        %v731 = vpack.c.bf16 %v707, %v706
        %v732 = vpack.c.bf16 %v709, %v708
        %v733 = vpack.c.bf16 %v711, %v710
        %v734 = vpack.c.bf16 %v713, %v712
        %v735 = vpack.c.bf16 %v715, %v714
        %v736 = vpack.c.bf16 %v717, %v716
        %v737 = vpack.c.bf16 %v719, %v718
        %v738 = vpack.c.bf16 %v721, %v720
        %v739 = vpack.c.bf16 %v723, %v722
        %v740 = vpack.c.bf16 %v633, %v630
        %v741 = vpack.c.bf16 %v641, %v638
        %v742 = vpack.c.bf16 %v649, %v646
        %v743 = vpack.c.bf16 %v657, %v654
        %v744 = vpack.c.bf16 %v665, %v662
        %v745 = vpack.c.bf16 %v673, %v670
        %v746 = vpack.c.bf16 %v681, %v678
        %v747 = vpack.c.bf16 %v689, %v686
        %748 = vmatprep.subr.bf16.mxu0 0
        %749 = vmatpush1.bf16.msra.mxu0 %v740
        %750 = vmatprep.subr.bf16.mxu0 0
        %751 = vmatpush1.bf16.msra.mxu0 %v741
        %752 = vmatprep.subr.bf16.mxu0 0
        %753 = vmatpush1.bf16.msra.mxu0 %v742
        %754 = vmatprep.subr.bf16.mxu0 0
        %755 = vmatpush1.bf16.msra.mxu0 %v743
        %756 = vmatprep.subr.bf16.mxu0 0
        %757 = vmatpush1.bf16.msra.mxu0 %v744
        %758 = vmatprep.subr.bf16.mxu0 0
        %759 = vmatpush1.bf16.msra.mxu0 %v745
        %760 = vmatprep.subr.bf16.mxu0 0
        %761 = vmatpush1.bf16.msra.mxu0 %v746
        %762 = vmatprep.subr.bf16.mxu0 0
        %763 = vmatpush1.bf16.msra.mxu0 %v747
        %764 = vmatprep.subr.bf16.mxu0 0
        %765 = vmatpush1.bf16.msra.mxu0 0
        %766 = vmatprep.subr.bf16.mxu0 0
        %767 = vmatpush1.bf16.msra.mxu0 0
        %768 = vmatprep.subr.bf16.mxu0 0
        %769 = vmatpush1.bf16.msra.mxu0 0
        %770 = vmatprep.subr.bf16.mxu0 0
        %771 = vmatpush1.bf16.msra.mxu0 0
        %772 = vmatprep.subr.bf16.mxu0 0
        %773 = vmatpush1.bf16.msra.mxu0 0
        %774 = vmatprep.subr.bf16.mxu0 0
        %775 = vmatpush1.bf16.msra.mxu0 0
        %776 = vmatprep.subr.bf16.mxu0 0
        %777 = vmatpush1.bf16.msra.mxu0 0
        %778 = vmatprep.subr.bf16.mxu0 0
        %779 = vmatpush1.bf16.msra.mxu0 0
        %780 = vmatprep.mubr.bf16.mxu0 0
        %781 = vmatmul.mubr.bf16.gmra.mrb[0].mxu0 %v724
        %v782 = vpop.f32.mrb[0].mxu0
        %v783 = vadd.f32 0.0, %v782
        %v784 = vpop.f32.mrb[0].mxu0
        %v785 = vpop.f32.mrb[0].mxu0
        %v786 = vadd.f32 0.0, %v785
        %v787 = vpop.f32.mrb[0].mxu0
        %788 = vmatprep.mubr.bf16.mxu0 0
        %789 = vmatmul.mubr.bf16.gmra.mrb[0].mxu0 %v725
        %v790 = vpop.f32.mrb[0].mxu0
        %v791 = vadd.f32 0.0, %v790
        %v792 = vpop.f32.mrb[0].mxu0
        %v793 = vpop.f32.mrb[0].mxu0
        %v794 = vadd.f32 0.0, %v793
        %v795 = vpop.f32.mrb[0].mxu0
        %796 = vmatprep.mubr.bf16.mxu0 0
        %797 = vmatmul.mubr.bf16.gmra.mrb[0].mxu0 %v726
        %v798 = vpop.f32.mrb[0].mxu0
        %v799 = vadd.f32 0.0, %v798
        %v800 = vpop.f32.mrb[0].mxu0
        %v801 = vpop.f32.mrb[0].mxu0
        %v802 = vadd.f32 0.0, %v801
        %v803 = vpop.f32.mrb[0].mxu0
        %804 = vmatprep.mubr.bf16.mxu0 0
        %805 = vmatmul.mubr.bf16.gmra.mrb[0].mxu0 %v727
        %v806 = vpop.f32.mrb[0].mxu0
        %v807 = vadd.f32 0.0, %v806
        %v808 = vpop.f32.mrb[0].mxu0
        %v809 = vpop.f32.mrb[0].mxu0
        %v810 = vadd.f32 0.0, %v809
        %v811 = vpop.f32.mrb[0].mxu0
        %812 = vmatprep.mubr.bf16.mxu0 0
        %813 = vmatmul.mubr.bf16.gmra.mrb[0].mxu0 %v728
        %v814 = vpop.f32.mrb[0].mxu0
        %v815 = vadd.f32 0.0, %v814
        %v816 = vpop.f32.mrb[0].mxu0
        %v817 = vpop.f32.mrb[0].mxu0
        %v818 = vadd.f32 0.0, %v817
        %v819 = vpop.f32.mrb[0].mxu0
        %820 = vmatprep.mubr.bf16.mxu0 0
        %821 = vmatmul.mubr.bf16.gmra.mrb[0].mxu0 %v729
        %v822 = vpop.f32.mrb[0].mxu0
        %v823 = vadd.f32 0.0, %v822
        %v824 = vpop.f32.mrb[0].mxu0
        %v825 = vpop.f32.mrb[0].mxu0
        %v826 = vadd.f32 0.0, %v825
        %v827 = vpop.f32.mrb[0].mxu0
        %828 = vmatprep.mubr.bf16.mxu0 0
        %829 = vmatmul.mubr.bf16.gmra.mrb[0].mxu0 %v730
        %v830 = vpop.f32.mrb[0].mxu0
        %v831 = vadd.f32 0.0, %v830
        %v832 = vpop.f32.mrb[0].mxu0
        %v833 = vpop.f32.mrb[0].mxu0
        %v834 = vadd.f32 0.0, %v833
        %v835 = vpop.f32.mrb[0].mxu0
        %836 = vmatprep.mubr.bf16.mxu0 0
        %837 = vmatmul.mubr.bf16.gmra.mrb[0].mxu0 %v731
        %v838 = vpop.f32.mrb[0].mxu0
        %v839 = vadd.f32 0.0, %v838
        %v840 = vpop.f32.mrb[0].mxu0
        %v841 = vpop.f32.mrb[0].mxu0
        %v842 = vadd.f32 0.0, %v841
        %v843 = vpop.f32.mrb[0].mxu0
        %844 = vmatprep.mubr.bf16.mxu0 0
        %845 = vmatmul.mubr.bf16.gmra.mrb[0].mxu0 %v732
        %v846 = vpop.f32.mrb[0].mxu0
        %v847 = vadd.f32 0.0, %v846
        %v848 = vpop.f32.mrb[0].mxu0
        %v849 = vpop.f32.mrb[0].mxu0
        %v850 = vadd.f32 0.0, %v849
        %v851 = vpop.f32.mrb[0].mxu0
        %852 = vmatprep.mubr.bf16.mxu0 0
        %853 = vmatmul.mubr.bf16.gmra.mrb[0].mxu0 %v733
        %v854 = vpop.f32.mrb[0].mxu0
        %v855 = vadd.f32 0.0, %v854
        %v856 = vpop.f32.mrb[0].mxu0
        %v857 = vpop.f32.mrb[0].mxu0
        %v858 = vadd.f32 0.0, %v857
        %v859 = vpop.f32.mrb[0].mxu0
        %860 = vmatprep.mubr.bf16.mxu0 0
        %861 = vmatmul.mubr.bf16.gmra.mrb[0].mxu0 %v734
        %v862 = vpop.f32.mrb[0].mxu0
        %v863 = vadd.f32 0.0, %v862
        %v864 = vpop.f32.mrb[0].mxu0
        %v865 = vpop.f32.mrb[0].mxu0
        %v866 = vadd.f32 0.0, %v865
        %v867 = vpop.f32.mrb[0].mxu0
        %868 = vmatprep.mubr.bf16.mxu0 0
        %869 = vmatmul.mubr.bf16.gmra.mrb[0].mxu0 %v735
        %v870 = vpop.f32.mrb[0].mxu0
        %v871 = vadd.f32 0.0, %v870
        %v872 = vpop.f32.mrb[0].mxu0
        %v873 = vpop.f32.mrb[0].mxu0
        %v874 = vadd.f32 0.0, %v873
        %v875 = vpop.f32.mrb[0].mxu0
        %876 = vmatprep.mubr.bf16.mxu0 0
        %877 = vmatmul.mubr.bf16.gmra.mrb[0].mxu0 %v736
        %v878 = vpop.f32.mrb[0].mxu0
        %v879 = vadd.f32 0.0, %v878
        %v880 = vpop.f32.mrb[0].mxu0
        %v881 = vpop.f32.mrb[0].mxu0
        %v882 = vadd.f32 0.0, %v881
        %v883 = vpop.f32.mrb[0].mxu0
        %884 = vmatprep.mubr.bf16.mxu0 0
        %885 = vmatmul.mubr.bf16.gmra.mrb[0].mxu0 %v737
        %v886 = vpop.f32.mrb[0].mxu0
        %v887 = vadd.f32 0.0, %v886
        %v888 = vpop.f32.mrb[0].mxu0
        %v889 = vpop.f32.mrb[0].mxu0
        %v890 = vadd.f32 0.0, %v889
        %v891 = vpop.f32.mrb[0].mxu0
        %892 = vmatprep.mubr.bf16.mxu0 0
        %893 = vmatmul.mubr.bf16.gmra.mrb[0].mxu0 %v738
        %v894 = vpop.f32.mrb[0].mxu0
        %v895 = vadd.f32 0.0, %v894
        %v896 = vpop.f32.mrb[0].mxu0
        %v897 = vpop.f32.mrb[0].mxu0
        %v898 = vadd.f32 0.0, %v897
        %v899 = vpop.f32.mrb[0].mxu0
        %900 = vmatprep.mubr.bf16.mxu0 0
        %901 = vmatmul.mubr.bf16.gmra.mrb[0].mxu0 %v739
        %v902 = vpop.f32.mrb[0].mxu0
        %v903 = vadd.f32 0.0, %v902
        %v904 = vpop.f32.mrb[0].mxu0
        %v905 = vpop.f32.mrb[0].mxu0
        %v906 = vadd.f32 0.0, %v905
        %v907 = vpop.f32.mrb[0].mxu0
        %908 = vdwg.mxu0
        %s909 = smul.u32 %s23, 256
        %s910 = scalar_lea.vmem [#allocation2], %s909
        %vm911 = vcmask 523264
        %912 = vst.msk [vmem:[%s910] sm:$0xff] %vm911, %v783
        %913 = vst.msk [vmem:[%s910 + $0x8] sm:$0xff] %vm911, %v786
        %914 = vst.msk [vmem:[%s910 + $0x10] sm:$0xff] %vm911, %v791
        %915 = vst.msk [vmem:[%s910 + $0x18] sm:$0xff] %vm911, %v794
        %916 = vst.msk [vmem:[%s910 + $0x20] sm:$0xff] %vm911, %v799
        %917 = vst.msk [vmem:[%s910 + $0x28] sm:$0xff] %vm911, %v802
        %918 = vst.msk [vmem:[%s910 + $0x30] sm:$0xff] %vm911, %v807
        %919 = vst.msk [vmem:[%s910 + $0x38] sm:$0xff] %vm911, %v810
        %920 = vst.msk [vmem:[%s910 + $0x40] sm:$0xff] %vm911, %v815
        %921 = vst.msk [vmem:[%s910 + $0x48] sm:$0xff] %vm911, %v818
        %922 = vst.msk [vmem:[%s910 + $0x50] sm:$0xff] %vm911, %v823
        %923 = vst.msk [vmem:[%s910 + $0x58] sm:$0xff] %vm911, %v826
        %924 = vst.msk [vmem:[%s910 + $0x60] sm:$0xff] %vm911, %v831
        %925 = vst.msk [vmem:[%s910 + $0x68] sm:$0xff] %vm911, %v834
        %926 = vst.msk [vmem:[%s910 + $0x70] sm:$0xff] %vm911, %v839
        %927 = vst.msk [vmem:[%s910 + $0x78] sm:$0xff] %vm911, %v842
        %928 = vst.msk [vmem:[%s910 + $0x80] sm:$0xff] %vm911, %v847
        %929 = vst.msk [vmem:[%s910 + $0x88] sm:$0xff] %vm911, %v850
        %930 = vst.msk [vmem:[%s910 + $0x90] sm:$0xff] %vm911, %v855
        %931 = vst.msk [vmem:[%s910 + $0x98] sm:$0xff] %vm911, %v858
        %932 = vst.msk [vmem:[%s910 + $0xa0] sm:$0xff] %vm911, %v863
        %933 = vst.msk [vmem:[%s910 + $0xa8] sm:$0xff] %vm911, %v866
        %934 = vst.msk [vmem:[%s910 + $0xb0] sm:$0xff] %vm911, %v871
        %935 = vst.msk [vmem:[%s910 + $0xb8] sm:$0xff] %vm911, %v874
        %936 = vst.msk [vmem:[%s910 + $0xc0] sm:$0xff] %vm911, %v879
        %937 = vst.msk [vmem:[%s910 + $0xc8] sm:$0xff] %vm911, %v882
        %938 = vst.msk [vmem:[%s910 + $0xd0] sm:$0xff] %vm911, %v887
        %939 = vst.msk [vmem:[%s910 + $0xd8] sm:$0xff] %vm911, %v890
        %940 = vst.msk [vmem:[%s910 + $0xe0] sm:$0xff] %vm911, %v895
        %941 = vst.msk [vmem:[%s910 + $0xe8] sm:$0xff] %vm911, %v898
        %942 = vst.msk [vmem:[%s910 + $0xf0] sm:$0xff] %vm911, %v903
        %943 = vst.msk [vmem:[%s910 + $0xf8] sm:$0xff] %vm911, %v906
        %v944 = vld [vmem:[#allocation3] sm:$0xff]
        %v945 = vld [vmem:[#allocation3 + $0x8] sm:$0xff]
        %v946 = vld [vmem:[#allocation3 + $0x10] sm:$0xff]
        %v947 = vld [vmem:[#allocation3 + $0x18] sm:$0xff]
        %v948 = vld [vmem:[#allocation3 + $0x20] sm:$0xff]
        %v949 = vld [vmem:[#allocation3 + $0x28] sm:$0xff]
        %v950 = vld [vmem:[#allocation3 + $0x30] sm:$0xff]
        %v951 = vld [vmem:[#allocation3 + $0x38] sm:$0xff]
        %v952 = vld [vmem:[#allocation3 + $0x40] sm:$0xff]
        %v953 = vld [vmem:[#allocation3 + $0x48] sm:$0xff]
        %v954 = vld [vmem:[#allocation3 + $0x50] sm:$0xff]
        %v955 = vld [vmem:[#allocation3 + $0x58] sm:$0xff]
        %v956 = vld [vmem:[#allocation3 + $0x60] sm:$0xff]
        %v957 = vld [vmem:[#allocation3 + $0x68] sm:$0xff]
        %v958 = vld [vmem:[#allocation3 + $0x70] sm:$0xff]
        %v959 = vld [vmem:[#allocation3 + $0x78] sm:$0xff]
        %v960 = vld [vmem:[#allocation3 + $0x80] sm:$0xff]
        %v961 = vld [vmem:[#allocation3 + $0x88] sm:$0xff]
        %v962 = vld [vmem:[#allocation3 + $0x90] sm:$0xff]
        %v963 = vld [vmem:[#allocation3 + $0x98] sm:$0xff]
        %v964 = vld [vmem:[#allocation3 + $0xa0] sm:$0xff]
        %v965 = vld [vmem:[#allocation3 + $0xa8] sm:$0xff]
        %v966 = vld [vmem:[#allocation3 + $0xb0] sm:$0xff]
        %v967 = vld [vmem:[#allocation3 + $0xb8] sm:$0xff]
        %v968 = vld [vmem:[#allocation3 + $0xc0] sm:$0xff]
        %v969 = vld [vmem:[#allocation3 + $0xc8] sm:$0xff]
        %v970 = vld [vmem:[#allocation3 + $0xd0] sm:$0xff]
        %v971 = vld [vmem:[#allocation3 + $0xd8] sm:$0xff]
        %v972 = vld [vmem:[#allocation3 + $0xe0] sm:$0xff]
        %v973 = vld [vmem:[#allocation3 + $0xe8] sm:$0xff]
        %v974 = vld [vmem:[#allocation3 + $0xf0] sm:$0xff]
        %v975 = vld [vmem:[#allocation3 + $0xf8] sm:$0xff]
        %v976 = vsel %vm911, %v783, 0.0
        %977 = vadd.xlane.f32.xlu0 %v976
        %v978 = vpop.xlane.xlu0 %977
        %v979 = vsel %vm911, %v786, 0.0
        %980 = vadd.xlane.f32.xlu0 %v979
        %v981 = vpop.xlane.xlu0 %980
        %v982 = vsel %vm911, %v791, 0.0
        %983 = vadd.xlane.f32.xlu0 %v982
        %v984 = vpop.xlane.xlu0 %983
        %v985 = vsel %vm911, %v794, 0.0
        %986 = vadd.xlane.f32.xlu0 %v985
        %v987 = vpop.xlane.xlu0 %986
        %v988 = vsel %vm911, %v799, 0.0
        %989 = vadd.xlane.f32.xlu0 %v988
        %v990 = vpop.xlane.xlu0 %989
        %v991 = vsel %vm911, %v802, 0.0
        %992 = vadd.xlane.f32.xlu0 %v991
        %v993 = vpop.xlane.xlu0 %992
        %v994 = vsel %vm911, %v807, 0.0
        %995 = vadd.xlane.f32.xlu0 %v994
        %v996 = vpop.xlane.xlu0 %995
        %v997 = vsel %vm911, %v810, 0.0
        %998 = vadd.xlane.f32.xlu0 %v997
        %v999 = vpop.xlane.xlu0 %998
        %v1000 = vsel %vm911, %v815, 0.0
        %1001 = vadd.xlane.f32.xlu0 %v1000
        %v1002 = vpop.xlane.xlu0 %1001
        %v1003 = vsel %vm911, %v818, 0.0
        %1004 = vadd.xlane.f32.xlu0 %v1003
        %v1005 = vpop.xlane.xlu0 %1004
        %v1006 = vsel %vm911, %v823, 0.0
        %1007 = vadd.xlane.f32.xlu0 %v1006
        %v1008 = vpop.xlane.xlu0 %1007
        %v1009 = vsel %vm911, %v826, 0.0
        %1010 = vadd.xlane.f32.xlu0 %v1009
        %v1011 = vpop.xlane.xlu0 %1010
        %v1012 = vsel %vm911, %v831, 0.0
        %1013 = vadd.xlane.f32.xlu0 %v1012
        %v1014 = vpop.xlane.xlu0 %1013
        %v1015 = vsel %vm911, %v834, 0.0
        %1016 = vadd.xlane.f32.xlu0 %v1015
        %v1017 = vpop.xlane.xlu0 %1016
        %v1018 = vsel %vm911, %v839, 0.0
        %1019 = vadd.xlane.f32.xlu0 %v1018
        %v1020 = vpop.xlane.xlu0 %1019
        %v1021 = vsel %vm911, %v842, 0.0
        %1022 = vadd.xlane.f32.xlu0 %v1021
        %v1023 = vpop.xlane.xlu0 %1022
        %v1024 = vsel %vm911, %v847, 0.0
        %1025 = vadd.xlane.f32.xlu0 %v1024
        %v1026 = vpop.xlane.xlu0 %1025
        %v1027 = vsel %vm911, %v850, 0.0
        %1028 = vadd.xlane.f32.xlu0 %v1027
        %v1029 = vpop.xlane.xlu0 %1028
        %v1030 = vsel %vm911, %v855, 0.0
        %1031 = vadd.xlane.f32.xlu0 %v1030
        %v1032 = vpop.xlane.xlu0 %1031
        %v1033 = vsel %vm911, %v858, 0.0
        %1034 = vadd.xlane.f32.xlu0 %v1033
        %v1035 = vpop.xlane.xlu0 %1034
        %v1036 = vsel %vm911, %v863, 0.0
        %1037 = vadd.xlane.f32.xlu0 %v1036
        %v1038 = vpop.xlane.xlu0 %1037
        %v1039 = vsel %vm911, %v866, 0.0
        %1040 = vadd.xlane.f32.xlu0 %v1039
        %v1041 = vpop.xlane.xlu0 %1040
        %v1042 = vsel %vm911, %v871, 0.0
        %1043 = vadd.xlane.f32.xlu0 %v1042
        %v1044 = vpop.xlane.xlu0 %1043
        %v1045 = vsel %vm911, %v874, 0.0
        %1046 = vadd.xlane.f32.xlu0 %v1045
        %v1047 = vpop.xlane.xlu0 %1046
        %v1048 = vsel %vm911, %v879, 0.0
        %1049 = vadd.xlane.f32.xlu0 %v1048
        %v1050 = vpop.xlane.xlu0 %1049
        %v1051 = vsel %vm911, %v882, 0.0
        %1052 = vadd.xlane.f32.xlu0 %v1051
        %v1053 = vpop.xlane.xlu0 %1052
        %v1054 = vsel %vm911, %v887, 0.0
        %1055 = vadd.xlane.f32.xlu0 %v1054
        %v1056 = vpop.xlane.xlu0 %1055
        %v1057 = vsel %vm911, %v890, 0.0
        %1058 = vadd.xlane.f32.xlu0 %v1057
        %v1059 = vpop.xlane.xlu0 %1058
        %v1060 = vsel %vm911, %v895, 0.0
        %1061 = vadd.xlane.f32.xlu0 %v1060
        %v1062 = vpop.xlane.xlu0 %1061
        %v1063 = vsel %vm911, %v898, 0.0
        %1064 = vadd.xlane.f32.xlu0 %v1063
        %v1065 = vpop.xlane.xlu0 %1064
        %v1066 = vsel %vm911, %v903, 0.0
        %1067 = vadd.xlane.f32.xlu0 %v1066
        %v1068 = vpop.xlane.xlu0 %1067
        %v1069 = vsel %vm911, %v906, 0.0
        %1070 = vadd.xlane.f32.xlu0 %v1069
        %v1071 = vpop.xlane.xlu0 %1070
        %v1072 = vadd.f32 %v944, %v978
        %v1073 = vadd.f32 %v945, %v981
        %v1074 = vadd.f32 %v946, %v984
        %v1075 = vadd.f32 %v947, %v987
        %v1076 = vadd.f32 %v948, %v990
        %v1077 = vadd.f32 %v949, %v993
        %v1078 = vadd.f32 %v950, %v996
        %v1079 = vadd.f32 %v951, %v999
        %v1080 = vadd.f32 %v952, %v1002
        %v1081 = vadd.f32 %v953, %v1005
        %v1082 = vadd.f32 %v954, %v1008
        %v1083 = vadd.f32 %v955, %v1011
        %v1084 = vadd.f32 %v956, %v1014
        %v1085 = vadd.f32 %v957, %v1017
        %v1086 = vadd.f32 %v958, %v1020
        %v1087 = vadd.f32 %v959, %v1023
        %v1088 = vadd.f32 %v960, %v1026
        %v1089 = vadd.f32 %v961, %v1029
        %v1090 = vadd.f32 %v962, %v1032
        %v1091 = vadd.f32 %v963, %v1035
        %v1092 = vadd.f32 %v964, %v1038
        %v1093 = vadd.f32 %v965, %v1041
        %v1094 = vadd.f32 %v966, %v1044
        %v1095 = vadd.f32 %v967, %v1047
        %v1096 = vadd.f32 %v968, %v1050
        %v1097 = vadd.f32 %v969, %v1053
        %v1098 = vadd.f32 %v970, %v1056
        %v1099 = vadd.f32 %v971, %v1059
        %v1100 = vadd.f32 %v972, %v1062
        %v1101 = vadd.f32 %v973, %v1065
        %v1102 = vadd.f32 %v974, %v1068
        %v1103 = vadd.f32 %v975, %v1071
        %vm1104 = vcmask 7168
        %1105 = vst.msk [vmem:[#allocation3] sm:$0xff] %vm1104, %v1072
        %1106 = vst.msk [vmem:[#allocation3 + $0x8] sm:$0xff] %vm1104, %v1073
        %1107 = vst.msk [vmem:[#allocation3 + $0x10] sm:$0xff] %vm1104, %v1074
        %1108 = vst.msk [vmem:[#allocation3 + $0x18] sm:$0xff] %vm1104, %v1075
        %1109 = vst.msk [vmem:[#allocation3 + $0x20] sm:$0xff] %vm1104, %v1076
        %1110 = vst.msk [vmem:[#allocation3 + $0x28] sm:$0xff] %vm1104, %v1077
        %1111 = vst.msk [vmem:[#allocation3 + $0x30] sm:$0xff] %vm1104, %v1078
        %1112 = vst.msk [vmem:[#allocation3 + $0x38] sm:$0xff] %vm1104, %v1079
        %1113 = vst.msk [vmem:[#allocation3 + $0x40] sm:$0xff] %vm1104, %v1080
        %1114 = vst.msk [vmem:[#allocation3 + $0x48] sm:$0xff] %vm1104, %v1081
        %1115 = vst.msk [vmem:[#allocation3 + $0x50] sm:$0xff] %vm1104, %v1082
        %1116 = vst.msk [vmem:[#allocation3 + $0x58] sm:$0xff] %vm1104, %v1083
        %1117 = vst.msk [vmem:[#allocation3 + $0x60] sm:$0xff] %vm1104, %v1084
        %1118 = vst.msk [vmem:[#allocation3 + $0x68] sm:$0xff] %vm1104, %v1085
        %1119 = vst.msk [vmem:[#allocation3 + $0x70] sm:$0xff] %vm1104, %v1086
        %1120 = vst.msk [vmem:[#allocation3 + $0x78] sm:$0xff] %vm1104, %v1087
        %1121 = vst.msk [vmem:[#allocation3 + $0x80] sm:$0xff] %vm1104, %v1088
        %1122 = vst.msk [vmem:[#allocation3 + $0x88] sm:$0xff] %vm1104, %v1089
        %1123 = vst.msk [vmem:[#allocation3 + $0x90] sm:$0xff] %vm1104, %v1090
        %1124 = vst.msk [vmem:[#allocation3 + $0x98] sm:$0xff] %vm1104, %v1091
        %1125 = vst.msk [vmem:[#allocation3 + $0xa0] sm:$0xff] %vm1104, %v1092
        %1126 = vst.msk [vmem:[#allocation3 + $0xa8] sm:$0xff] %vm1104, %v1093
        %1127 = vst.msk [vmem:[#allocation3 + $0xb0] sm:$0xff] %vm1104, %v1094
        %1128 = vst.msk [vmem:[#allocation3 + $0xb8] sm:$0xff] %vm1104, %v1095
        %1129 = vst.msk [vmem:[#allocation3 + $0xc0] sm:$0xff] %vm1104, %v1096
        %1130 = vst.msk [vmem:[#allocation3 + $0xc8] sm:$0xff] %vm1104, %v1097
        %1131 = vst.msk [vmem:[#allocation3 + $0xd0] sm:$0xff] %vm1104, %v1098
        %1132 = vst.msk [vmem:[#allocation3 + $0xd8] sm:$0xff] %vm1104, %v1099
        %1133 = vst.msk [vmem:[#allocation3 + $0xe0] sm:$0xff] %vm1104, %v1100
        %1134 = vst.msk [vmem:[#allocation3 + $0xe8] sm:$0xff] %vm1104, %v1101
        %1135 = vst.msk [vmem:[#allocation3 + $0xf0] sm:$0xff] %vm1104, %v1102
        %1136 = vst.msk [vmem:[#allocation3 + $0xf8] sm:$0xff] %vm1104, %v1103
        %v1137 = vld [vmem:[#allocation4] sm:$0xff]
        %v1138 = vld [vmem:[#allocation4 + $0x8] sm:$0xff]
        %v1139 = vld [vmem:[#allocation4 + $0x10] sm:$0xff]
        %v1140 = vld [vmem:[#allocation4 + $0x18] sm:$0xff]
        %v1141 = vld [vmem:[#allocation4 + $0x20] sm:$0xff]
        %v1142 = vld [vmem:[#allocation4 + $0x28] sm:$0xff]
        %v1143 = vld [vmem:[#allocation4 + $0x30] sm:$0xff]
        %v1144 = vld [vmem:[#allocation4 + $0x38] sm:$0xff]
        %v1145 = vld [vmem:[#allocation4 + $0x40] sm:$0xff]
        %v1146 = vld [vmem:[#allocation4 + $0x48] sm:$0xff]
        %v1147 = vld [vmem:[#allocation4 + $0x50] sm:$0xff]
        %v1148 = vld [vmem:[#allocation4 + $0x58] sm:$0xff]
        %v1149 = vld [vmem:[#allocation4 + $0x60] sm:$0xff]
        %v1150 = vld [vmem:[#allocation4 + $0x68] sm:$0xff]
        %v1151 = vld [vmem:[#allocation4 + $0x70] sm:$0xff]
        %v1152 = vld [vmem:[#allocation4 + $0x78] sm:$0xff]
        %v1153 = vld [vmem:[#allocation4 + $0x80] sm:$0xff]
        %v1154 = vld [vmem:[#allocation4 + $0x88] sm:$0xff]
        %v1155 = vld [vmem:[#allocation4 + $0x90] sm:$0xff]
        %v1156 = vld [vmem:[#allocation4 + $0x98] sm:$0xff]
        %v1157 = vld [vmem:[#allocation4 + $0xa0] sm:$0xff]
        %v1158 = vld [vmem:[#allocation4 + $0xa8] sm:$0xff]
        %v1159 = vld [vmem:[#allocation4 + $0xb0] sm:$0xff]
        %v1160 = vld [vmem:[#allocation4 + $0xb8] sm:$0xff]
        %v1161 = vld [vmem:[#allocation4 + $0xc0] sm:$0xff]
        %v1162 = vld [vmem:[#allocation4 + $0xc8] sm:$0xff]
        %v1163 = vld [vmem:[#allocation4 + $0xd0] sm:$0xff]
        %v1164 = vld [vmem:[#allocation4 + $0xd8] sm:$0xff]
        %v1165 = vld [vmem:[#allocation4 + $0xe0] sm:$0xff]
        %v1166 = vld [vmem:[#allocation4 + $0xe8] sm:$0xff]
        %v1167 = vld [vmem:[#allocation4 + $0xf0] sm:$0xff]
        %v1168 = vld [vmem:[#allocation4 + $0xf8] sm:$0xff]
        %v1169 = vmul.f32 %v783, %v783
        %v1170 = vmul.f32 %v786, %v786
        %v1171 = vmul.f32 %v791, %v791
        %v1172 = vmul.f32 %v794, %v794
        %v1173 = vmul.f32 %v799, %v799
        %v1174 = vmul.f32 %v802, %v802
        %v1175 = vmul.f32 %v807, %v807
        %v1176 = vmul.f32 %v810, %v810
        %v1177 = vmul.f32 %v815, %v815
        %v1178 = vmul.f32 %v818, %v818
        %v1179 = vmul.f32 %v823, %v823
        %v1180 = vmul.f32 %v826, %v826
        %v1181 = vmul.f32 %v831, %v831
        %v1182 = vmul.f32 %v834, %v834
        %v1183 = vmul.f32 %v839, %v839
        %v1184 = vmul.f32 %v842, %v842
        %v1185 = vmul.f32 %v847, %v847
        %v1186 = vmul.f32 %v850, %v850
        %v1187 = vmul.f32 %v855, %v855
        %v1188 = vmul.f32 %v858, %v858
        %v1189 = vmul.f32 %v863, %v863
        %v1190 = vmul.f32 %v866, %v866
        %v1191 = vmul.f32 %v871, %v871
        %v1192 = vmul.f32 %v874, %v874
        %v1193 = vmul.f32 %v879, %v879
        %v1194 = vmul.f32 %v882, %v882
        %v1195 = vmul.f32 %v887, %v887
        %v1196 = vmul.f32 %v890, %v890
        %v1197 = vmul.f32 %v895, %v895
        %v1198 = vmul.f32 %v898, %v898
        %v1199 = vmul.f32 %v903, %v903
        %v1200 = vmul.f32 %v906, %v906
        %v1201 = vsel %vm911, %v1169, 0.0
        %1202 = vadd.xlane.f32.xlu0 %v1201
        %v1203 = vpop.xlane.xlu0 %1202
        %v1204 = vsel %vm911, %v1170, 0.0
        %1205 = vadd.xlane.f32.xlu0 %v1204
        %v1206 = vpop.xlane.xlu0 %1205
        %v1207 = vsel %vm911, %v1171, 0.0
        %1208 = vadd.xlane.f32.xlu0 %v1207
        %v1209 = vpop.xlane.xlu0 %1208
        %v1210 = vsel %vm911, %v1172, 0.0
        %1211 = vadd.xlane.f32.xlu0 %v1210
        %v1212 = vpop.xlane.xlu0 %1211
        %v1213 = vsel %vm911, %v1173, 0.0
        %1214 = vadd.xlane.f32.xlu0 %v1213
        %v1215 = vpop.xlane.xlu0 %1214
        %v1216 = vsel %vm911, %v1174, 0.0
        %1217 = vadd.xlane.f32.xlu0 %v1216
        %v1218 = vpop.xlane.xlu0 %1217
        %v1219 = vsel %vm911, %v1175, 0.0
        %1220 = vadd.xlane.f32.xlu0 %v1219
        %v1221 = vpop.xlane.xlu0 %1220
        %v1222 = vsel %vm911, %v1176, 0.0
        %1223 = vadd.xlane.f32.xlu0 %v1222
        %v1224 = vpop.xlane.xlu0 %1223
        %v1225 = vsel %vm911, %v1177, 0.0
        %1226 = vadd.xlane.f32.xlu0 %v1225
        %v1227 = vpop.xlane.xlu0 %1226
        %v1228 = vsel %vm911, %v1178, 0.0
        %1229 = vadd.xlane.f32.xlu0 %v1228
        %v1230 = vpop.xlane.xlu0 %1229
        %v1231 = vsel %vm911, %v1179, 0.0
        %1232 = vadd.xlane.f32.xlu0 %v1231
        %v1233 = vpop.xlane.xlu0 %1232
        %v1234 = vsel %vm911, %v1180, 0.0
        %1235 = vadd.xlane.f32.xlu0 %v1234
        %v1236 = vpop.xlane.xlu0 %1235
        %v1237 = vsel %vm911, %v1181, 0.0
        %1238 = vadd.xlane.f32.xlu0 %v1237
        %v1239 = vpop.xlane.xlu0 %1238
        %v1240 = vsel %vm911, %v1182, 0.0
        %1241 = vadd.xlane.f32.xlu0 %v1240
        %v1242 = vpop.xlane.xlu0 %1241
        %v1243 = vsel %vm911, %v1183, 0.0
        %1244 = vadd.xlane.f32.xlu0 %v1243
        %v1245 = vpop.xlane.xlu0 %1244
        %v1246 = vsel %vm911, %v1184, 0.0
        %1247 = vadd.xlane.f32.xlu0 %v1246
        %v1248 = vpop.xlane.xlu0 %1247
        %v1249 = vsel %vm911, %v1185, 0.0
        %1250 = vadd.xlane.f32.xlu0 %v1249
        %v1251 = vpop.xlane.xlu0 %1250
        %v1252 = vsel %vm911, %v1186, 0.0
        %1253 = vadd.xlane.f32.xlu0 %v1252
        %v1254 = vpop.xlane.xlu0 %1253
        %v1255 = vsel %vm911, %v1187, 0.0
        %1256 = vadd.xlane.f32.xlu0 %v1255
        %v1257 = vpop.xlane.xlu0 %1256
        %v1258 = vsel %vm911, %v1188, 0.0
        %1259 = vadd.xlane.f32.xlu0 %v1258
        %v1260 = vpop.xlane.xlu0 %1259
        %v1261 = vsel %vm911, %v1189, 0.0
        %1262 = vadd.xlane.f32.xlu0 %v1261
        %v1263 = vpop.xlane.xlu0 %1262
        %v1264 = vsel %vm911, %v1190, 0.0
        %1265 = vadd.xlane.f32.xlu0 %v1264
        %v1266 = vpop.xlane.xlu0 %1265
        %v1267 = vsel %vm911, %v1191, 0.0
        %1268 = vadd.xlane.f32.xlu0 %v1267
        %v1269 = vpop.xlane.xlu0 %1268
        %v1270 = vsel %vm911, %v1192, 0.0
        %1271 = vadd.xlane.f32.xlu0 %v1270
        %v1272 = vpop.xlane.xlu0 %1271
        %v1273 = vsel %vm911, %v1193, 0.0
        %1274 = vadd.xlane.f32.xlu0 %v1273
        %v1275 = vpop.xlane.xlu0 %1274
        %v1276 = vsel %vm911, %v1194, 0.0
        %1277 = vadd.xlane.f32.xlu0 %v1276
        %v1278 = vpop.xlane.xlu0 %1277
        %v1279 = vsel %vm911, %v1195, 0.0
        %1280 = vadd.xlane.f32.xlu0 %v1279
        %v1281 = vpop.xlane.xlu0 %1280
        %v1282 = vsel %vm911, %v1196, 0.0
        %1283 = vadd.xlane.f32.xlu0 %v1282
        %v1284 = vpop.xlane.xlu0 %1283
        %v1285 = vsel %vm911, %v1197, 0.0
        %1286 = vadd.xlane.f32.xlu0 %v1285
        %v1287 = vpop.xlane.xlu0 %1286
        %v1288 = vsel %vm911, %v1198, 0.0
        %1289 = vadd.xlane.f32.xlu0 %v1288
        %v1290 = vpop.xlane.xlu0 %1289
        %v1291 = vsel %vm911, %v1199, 0.0
        %1292 = vadd.xlane.f32.xlu0 %v1291
        %v1293 = vpop.xlane.xlu0 %1292
        %v1294 = vsel %vm911, %v1200, 0.0
        %1295 = vadd.xlane.f32.xlu0 %v1294
        %v1296 = vpop.xlane.xlu0 %1295
        %v1297 = vadd.f32 %v1137, %v1203
        %v1298 = vadd.f32 %v1138, %v1206
        %v1299 = vadd.f32 %v1139, %v1209
        %v1300 = vadd.f32 %v1140, %v1212
        %v1301 = vadd.f32 %v1141, %v1215
        %v1302 = vadd.f32 %v1142, %v1218
        %v1303 = vadd.f32 %v1143, %v1221
        %v1304 = vadd.f32 %v1144, %v1224
        %v1305 = vadd.f32 %v1145, %v1227
        %v1306 = vadd.f32 %v1146, %v1230
        %v1307 = vadd.f32 %v1147, %v1233
        %v1308 = vadd.f32 %v1148, %v1236
        %v1309 = vadd.f32 %v1149, %v1239
        %v1310 = vadd.f32 %v1150, %v1242
        %v1311 = vadd.f32 %v1151, %v1245
        %v1312 = vadd.f32 %v1152, %v1248
        %v1313 = vadd.f32 %v1153, %v1251
        %v1314 = vadd.f32 %v1154, %v1254
        %v1315 = vadd.f32 %v1155, %v1257
        %v1316 = vadd.f32 %v1156, %v1260
        %v1317 = vadd.f32 %v1157, %v1263
        %v1318 = vadd.f32 %v1158, %v1266
        %v1319 = vadd.f32 %v1159, %v1269
        %v1320 = vadd.f32 %v1160, %v1272
        %v1321 = vadd.f32 %v1161, %v1275
        %v1322 = vadd.f32 %v1162, %v1278
        %v1323 = vadd.f32 %v1163, %v1281
        %v1324 = vadd.f32 %v1164, %v1284
        %v1325 = vadd.f32 %v1165, %v1287
        %v1326 = vadd.f32 %v1166, %v1290
        %v1327 = vadd.f32 %v1167, %v1293
        %v1328 = vadd.f32 %v1168, %v1296
        %1329 = vst.msk [vmem:[#allocation4] sm:$0xff] %vm1104, %v1297
        %1330 = vst.msk [vmem:[#allocation4 + $0x8] sm:$0xff] %vm1104, %v1298
        %1331 = vst.msk [vmem:[#allocation4 + $0x10] sm:$0xff] %vm1104, %v1299
        %1332 = vst.msk [vmem:[#allocation4 + $0x18] sm:$0xff] %vm1104, %v1300
        %1333 = vst.msk [vmem:[#allocation4 + $0x20] sm:$0xff] %vm1104, %v1301
        %1334 = vst.msk [vmem:[#allocation4 + $0x28] sm:$0xff] %vm1104, %v1302
        %1335 = vst.msk [vmem:[#allocation4 + $0x30] sm:$0xff] %vm1104, %v1303
        %1336 = vst.msk [vmem:[#allocation4 + $0x38] sm:$0xff] %vm1104, %v1304
        %1337 = vst.msk [vmem:[#allocation4 + $0x40] sm:$0xff] %vm1104, %v1305
        %1338 = vst.msk [vmem:[#allocation4 + $0x48] sm:$0xff] %vm1104, %v1306
        %1339 = vst.msk [vmem:[#allocation4 + $0x50] sm:$0xff] %vm1104, %v1307
        %1340 = vst.msk [vmem:[#allocation4 + $0x58] sm:$0xff] %vm1104, %v1308
        %1341 = vst.msk [vmem:[#allocation4 + $0x60] sm:$0xff] %vm1104, %v1309
        %1342 = vst.msk [vmem:[#allocation4 + $0x68] sm:$0xff] %vm1104, %v1310
        %1343 = vst.msk [vmem:[#allocation4 + $0x70] sm:$0xff] %vm1104, %v1311
        %1344 = vst.msk [vmem:[#allocation4 + $0x78] sm:$0xff] %vm1104, %v1312
        %1345 = vst.msk [vmem:[#allocation4 + $0x80] sm:$0xff] %vm1104, %v1313
        %1346 = vst.msk [vmem:[#allocation4 + $0x88] sm:$0xff] %vm1104, %v1314
        %1347 = vst.msk [vmem:[#allocation4 + $0x90] sm:$0xff] %vm1104, %v1315
        %1348 = vst.msk [vmem:[#allocation4 + $0x98] sm:$0xff] %vm1104, %v1316
        %1349 = vst.msk [vmem:[#allocation4 + $0xa0] sm:$0xff] %vm1104, %v1317
        %1350 = vst.msk [vmem:[#allocation4 + $0xa8] sm:$0xff] %vm1104, %v1318
        %1351 = vst.msk [vmem:[#allocation4 + $0xb0] sm:$0xff] %vm1104, %v1319
        %1352 = vst.msk [vmem:[#allocation4 + $0xb8] sm:$0xff] %vm1104, %v1320
        %1353 = vst.msk [vmem:[#allocation4 + $0xc0] sm:$0xff] %vm1104, %v1321
        %1354 = vst.msk [vmem:[#allocation4 + $0xc8] sm:$0xff] %vm1104, %v1322
        %1355 = vst.msk [vmem:[#allocation4 + $0xd0] sm:$0xff] %vm1104, %v1323
        %1356 = vst.msk [vmem:[#allocation4 + $0xd8] sm:$0xff] %vm1104, %v1324
        %1357 = vst.msk [vmem:[#allocation4 + $0xe0] sm:$0xff] %vm1104, %v1325
        %1358 = vst.msk [vmem:[#allocation4 + $0xe8] sm:$0xff] %vm1104, %v1326
        %1359 = vst.msk [vmem:[#allocation4 + $0xf0] sm:$0xff] %vm1104, %v1327
        %1360 = vst.msk [vmem:[#allocation4 + $0xf8] sm:$0xff] %vm1104, %v1328
      $region56: #{model_forward.1} parent=47 // pred_fallthru
        _
      %p1361 = scmp.eq.s32.totalorder %s22, 1
      %p1362 = pnand %p1361, %p346
      %p1363 = pneg %p1362
      // Predicated region
      $region57: #{model_forward.1} parent=47 // pred_check
        _
      $region58: #{model_forward.1} parent=47 // pred_check_branch
        %1365 = sbr.rel (%p1362) target = $region60
      $region59: #{model_forward.1} parent=47 // pred_region
        %v1366 = vld [vmem:[#allocation3] sm:$0xff]
        %v1367 = vld [vmem:[#allocation3 + $0x8] sm:$0xff]
        %v1368 = vld [vmem:[#allocation3 + $0x10] sm:$0xff]
        %v1369 = vld [vmem:[#allocation3 + $0x18] sm:$0xff]
        %v1370 = vld [vmem:[#allocation3 + $0x20] sm:$0xff]
        %v1371 = vld [vmem:[#allocation3 + $0x28] sm:$0xff]
        %v1372 = vld [vmem:[#allocation3 + $0x30] sm:$0xff]
        %v1373 = vld [vmem:[#allocation3 + $0x38] sm:$0xff]
        %v1374 = vld [vmem:[#allocation3 + $0x40] sm:$0xff]
        %v1375 = vld [vmem:[#allocation3 + $0x48] sm:$0xff]
        %v1376 = vld [vmem:[#allocation3 + $0x50] sm:$0xff]
        %v1377 = vld [vmem:[#allocation3 + $0x58] sm:$0xff]
        %v1378 = vld [vmem:[#allocation3 + $0x60] sm:$0xff]
        %v1379 = vld [vmem:[#allocation3 + $0x68] sm:$0xff]
        %v1380 = vld [vmem:[#allocation3 + $0x70] sm:$0xff]
        %v1381 = vld [vmem:[#allocation3 + $0x78] sm:$0xff]
        %v1382 = vld [vmem:[#allocation3 + $0x80] sm:$0xff]
        %v1383 = vld [vmem:[#allocation3 + $0x88] sm:$0xff]
        %v1384 = vld [vmem:[#allocation3 + $0x90] sm:$0xff]
        %v1385 = vld [vmem:[#allocation3 + $0x98] sm:$0xff]
        %v1386 = vld [vmem:[#allocation3 + $0xa0] sm:$0xff]
        %v1387 = vld [vmem:[#allocation3 + $0xa8] sm:$0xff]
        %v1388 = vld [vmem:[#allocation3 + $0xb0] sm:$0xff]
        %v1389 = vld [vmem:[#allocation3 + $0xb8] sm:$0xff]
        %v1390 = vld [vmem:[#allocation3 + $0xc0] sm:$0xff]
        %v1391 = vld [vmem:[#allocation3 + $0xc8] sm:$0xff]
        %v1392 = vld [vmem:[#allocation3 + $0xd0] sm:$0xff]
        %v1393 = vld [vmem:[#allocation3 + $0xd8] sm:$0xff]
        %v1394 = vld [vmem:[#allocation3 + $0xe0] sm:$0xff]
        %v1395 = vld [vmem:[#allocation3 + $0xe8] sm:$0xff]
        %v1396 = vld [vmem:[#allocation3 + $0xf0] sm:$0xff]
        %v1397 = vld [vmem:[#allocation3 + $0xf8] sm:$0xff]
        %v1398 = vrcp.pop 128.0
        %v1399 = vmul.f32 %v1366, %v1398
        %v1400 = vmul.f32 %v1367, %v1398
        %v1401 = vmul.f32 %v1368, %v1398
        %v1402 = vmul.f32 %v1369, %v1398
        %v1403 = vmul.f32 %v1370, %v1398
        %v1404 = vmul.f32 %v1371, %v1398
        %v1405 = vmul.f32 %v1372, %v1398
        %v1406 = vmul.f32 %v1373, %v1398
        %v1407 = vmul.f32 %v1374, %v1398
        %v1408 = vmul.f32 %v1375, %v1398
        %v1409 = vmul.f32 %v1376, %v1398
        %v1410 = vmul.f32 %v1377, %v1398
        %v1411 = vmul.f32 %v1378, %v1398
        %v1412 = vmul.f32 %v1379, %v1398
        %v1413 = vmul.f32 %v1380, %v1398
        %v1414 = vmul.f32 %v1381, %v1398
        %v1415 = vmul.f32 %v1382, %v1398
        %v1416 = vmul.f32 %v1383, %v1398
        %v1417 = vmul.f32 %v1384, %v1398
        %v1418 = vmul.f32 %v1385, %v1398
        %v1419 = vmul.f32 %v1386, %v1398
        %v1420 = vmul.f32 %v1387, %v1398
        %v1421 = vmul.f32 %v1388, %v1398
        %v1422 = vmul.f32 %v1389, %v1398
        %v1423 = vmul.f32 %v1390, %v1398
        %v1424 = vmul.f32 %v1391, %v1398
        %v1425 = vmul.f32 %v1392, %v1398
        %v1426 = vmul.f32 %v1393, %v1398
        %v1427 = vmul.f32 %v1394, %v1398
        %v1428 = vmul.f32 %v1395, %v1398
        %v1429 = vmul.f32 %v1396, %v1398
        %v1430 = vmul.f32 %v1397, %v1398
        %v1431 = vld [vmem:[#allocation4] sm:$0xff]
        %v1432 = vld [vmem:[#allocation4 + $0x8] sm:$0xff]
        %v1433 = vld [vmem:[#allocation4 + $0x10] sm:$0xff]
        %v1434 = vld [vmem:[#allocation4 + $0x18] sm:$0xff]
        %v1435 = vld [vmem:[#allocation4 + $0x20] sm:$0xff]
        %v1436 = vld [vmem:[#allocation4 + $0x28] sm:$0xff]
        %v1437 = vld [vmem:[#allocation4 + $0x30] sm:$0xff]
        %v1438 = vld [vmem:[#allocation4 + $0x38] sm:$0xff]
        %v1439 = vld [vmem:[#allocation4 + $0x40] sm:$0xff]
        %v1440 = vld [vmem:[#allocation4 + $0x48] sm:$0xff]
        %v1441 = vld [vmem:[#allocation4 + $0x50] sm:$0xff]
        %v1442 = vld [vmem:[#allocation4 + $0x58] sm:$0xff]
        %v1443 = vld [vmem:[#allocation4 + $0x60] sm:$0xff]
        %v1444 = vld [vmem:[#allocation4 + $0x68] sm:$0xff]
        %v1445 = vld [vmem:[#allocation4 + $0x70] sm:$0xff]
        %v1446 = vld [vmem:[#allocation4 + $0x78] sm:$0xff]
        %v1447 = vld [vmem:[#allocation4 + $0x80] sm:$0xff]
        %v1448 = vld [vmem:[#allocation4 + $0x88] sm:$0xff]
        %v1449 = vld [vmem:[#allocation4 + $0x90] sm:$0xff]
        %v1450 = vld [vmem:[#allocation4 + $0x98] sm:$0xff]
        %v1451 = vld [vmem:[#allocation4 + $0xa0] sm:$0xff]
        %v1452 = vld [vmem:[#allocation4 + $0xa8] sm:$0xff]
        %v1453 = vld [vmem:[#allocation4 + $0xb0] sm:$0xff]
        %v1454 = vld [vmem:[#allocation4 + $0xb8] sm:$0xff]
        %v1455 = vld [vmem:[#allocation4 + $0xc0] sm:$0xff]
        %v1456 = vld [vmem:[#allocation4 + $0xc8] sm:$0xff]
        %v1457 = vld [vmem:[#allocation4 + $0xd0] sm:$0xff]
        %v1458 = vld [vmem:[#allocation4 + $0xd8] sm:$0xff]
        %v1459 = vld [vmem:[#allocation4 + $0xe0] sm:$0xff]
        %v1460 = vld [vmem:[#allocation4 + $0xe8] sm:$0xff]
        %v1461 = vld [vmem:[#allocation4 + $0xf0] sm:$0xff]
        %v1462 = vld [vmem:[#allocation4 + $0xf8] sm:$0xff]
        %v1463 = vmul.f32 %v1431, %v1398
        %v1464 = vmul.f32 %v1432, %v1398
        %v1465 = vmul.f32 %v1433, %v1398
        %v1466 = vmul.f32 %v1434, %v1398
        %v1467 = vmul.f32 %v1435, %v1398
        %v1468 = vmul.f32 %v1436, %v1398
        %v1469 = vmul.f32 %v1437, %v1398
        %v1470 = vmul.f32 %v1438, %v1398
        %v1471 = vmul.f32 %v1439, %v1398
        %v1472 = vmul.f32 %v1440, %v1398
        %v1473 = vmul.f32 %v1441, %v1398
        %v1474 = vmul.f32 %v1442, %v1398
        %v1475 = vmul.f32 %v1443, %v1398
        %v1476 = vmul.f32 %v1444, %v1398
        %v1477 = vmul.f32 %v1445, %v1398
        %v1478 = vmul.f32 %v1446, %v1398
        %v1479 = vmul.f32 %v1447, %v1398
        %v1480 = vmul.f32 %v1448, %v1398
        %v1481 = vmul.f32 %v1449, %v1398
        %v1482 = vmul.f32 %v1450, %v1398
        %v1483 = vmul.f32 %v1451, %v1398
        %v1484 = vmul.f32 %v1452, %v1398
        %v1485 = vmul.f32 %v1453, %v1398
        %v1486 = vmul.f32 %v1454, %v1398
        %v1487 = vmul.f32 %v1455, %v1398
        %v1488 = vmul.f32 %v1456, %v1398
        %v1489 = vmul.f32 %v1457, %v1398
        %v1490 = vmul.f32 %v1458, %v1398
        %v1491 = vmul.f32 %v1459, %v1398
        %v1492 = vmul.f32 %v1460, %v1398
        %v1493 = vmul.f32 %v1461, %v1398
        %v1494 = vmul.f32 %v1462, %v1398
        %v1495 = vmul.f32 %v1399, %v1399
        %v1496 = vmul.f32 %v1400, %v1400
        %v1497 = vmul.f32 %v1401, %v1401
        %v1498 = vmul.f32 %v1402, %v1402
        %v1499 = vmul.f32 %v1403, %v1403
        %v1500 = vmul.f32 %v1404, %v1404
        %v1501 = vmul.f32 %v1405, %v1405
        %v1502 = vmul.f32 %v1406, %v1406
        %v1503 = vmul.f32 %v1407, %v1407
        %v1504 = vmul.f32 %v1408, %v1408
        %v1505 = vmul.f32 %v1409, %v1409
        %v1506 = vmul.f32 %v1410, %v1410
        %v1507 = vmul.f32 %v1411, %v1411
        %v1508 = vmul.f32 %v1412, %v1412
        %v1509 = vmul.f32 %v1413, %v1413
        %v1510 = vmul.f32 %v1414, %v1414
        %v1511 = vmul.f32 %v1415, %v1415
        %v1512 = vmul.f32 %v1416, %v1416
        %v1513 = vmul.f32 %v1417, %v1417
        %v1514 = vmul.f32 %v1418, %v1418
        %v1515 = vmul.f32 %v1419, %v1419
        %v1516 = vmul.f32 %v1420, %v1420
        %v1517 = vmul.f32 %v1421, %v1421
        %v1518 = vmul.f32 %v1422, %v1422
        %v1519 = vmul.f32 %v1423, %v1423
        %v1520 = vmul.f32 %v1424, %v1424
        %v1521 = vmul.f32 %v1425, %v1425
        %v1522 = vmul.f32 %v1426, %v1426
        %v1523 = vmul.f32 %v1427, %v1427
        %v1524 = vmul.f32 %v1428, %v1428
        %v1525 = vmul.f32 %v1429, %v1429
        %v1526 = vmul.f32 %v1430, %v1430
        %v1527 = vsub.f32 %v1463, %v1495
        %v1528 = vsub.f32 %v1464, %v1496
        %v1529 = vsub.f32 %v1465, %v1497
        %v1530 = vsub.f32 %v1466, %v1498
        %v1531 = vsub.f32 %v1467, %v1499
        %v1532 = vsub.f32 %v1468, %v1500
        %v1533 = vsub.f32 %v1469, %v1501
        %v1534 = vsub.f32 %v1470, %v1502
        %v1535 = vsub.f32 %v1471, %v1503
        %v1536 = vsub.f32 %v1472, %v1504
        %v1537 = vsub.f32 %v1473, %v1505
        %v1538 = vsub.f32 %v1474, %v1506
        %v1539 = vsub.f32 %v1475, %v1507
        %v1540 = vsub.f32 %v1476, %v1508
        %v1541 = vsub.f32 %v1477, %v1509
        %v1542 = vsub.f32 %v1478, %v1510
        %v1543 = vsub.f32 %v1479, %v1511
        %v1544 = vsub.f32 %v1480, %v1512
        %v1545 = vsub.f32 %v1481, %v1513
        %v1546 = vsub.f32 %v1482, %v1514
        %v1547 = vsub.f32 %v1483, %v1515
        %v1548 = vsub.f32 %v1484, %v1516
        %v1549 = vsub.f32 %v1485, %v1517
        %v1550 = vsub.f32 %v1486, %v1518
        %v1551 = vsub.f32 %v1487, %v1519
        %v1552 = vsub.f32 %v1488, %v1520
        %v1553 = vsub.f32 %v1489, %v1521
        %v1554 = vsub.f32 %v1490, %v1522
        %v1555 = vsub.f32 %v1491, %v1523
        %v1556 = vsub.f32 %v1492, %v1524
        %v1557 = vsub.f32 %v1493, %v1525
        %v1558 = vsub.f32 %v1494, %v1526
        %v1559 = vmax.f32 %v1527, 0.0
        %v1560 = vmax.f32 %v1528, 0.0
        %v1561 = vmax.f32 %v1529, 0.0
        %v1562 = vmax.f32 %v1530, 0.0
        %v1563 = vmax.f32 %v1531, 0.0
        %v1564 = vmax.f32 %v1532, 0.0
        %v1565 = vmax.f32 %v1533, 0.0
        %v1566 = vmax.f32 %v1534, 0.0
        %v1567 = vmax.f32 %v1535, 0.0
        %v1568 = vmax.f32 %v1536, 0.0
        %v1569 = vmax.f32 %v1537, 0.0
        %v1570 = vmax.f32 %v1538, 0.0
        %v1571 = vmax.f32 %v1539, 0.0
        %v1572 = vmax.f32 %v1540, 0.0
        %v1573 = vmax.f32 %v1541, 0.0
        %v1574 = vmax.f32 %v1542, 0.0
        %v1575 = vmax.f32 %v1543, 0.0
        %v1576 = vmax.f32 %v1544, 0.0
        %v1577 = vmax.f32 %v1545, 0.0
        %v1578 = vmax.f32 %v1546, 0.0
        %v1579 = vmax.f32 %v1547, 0.0
        %v1580 = vmax.f32 %v1548, 0.0
        %v1581 = vmax.f32 %v1549, 0.0
        %v1582 = vmax.f32 %v1550, 0.0
        %v1583 = vmax.f32 %v1551, 0.0
        %v1584 = vmax.f32 %v1552, 0.0
        %v1585 = vmax.f32 %v1553, 0.0
        %v1586 = vmax.f32 %v1554, 0.0
        %v1587 = vmax.f32 %v1555, 0.0
        %v1588 = vmax.f32 %v1556, 0.0
        %v1589 = vmax.f32 %v1557, 0.0
        %v1590 = vmax.f32 %v1558, 0.0
        %v1591 = vadd.f32 %v1559, 1e-05
        %v1592 = vadd.f32 %v1560, 1e-05
        %v1593 = vadd.f32 %v1561, 1e-05
        %v1594 = vadd.f32 %v1562, 1e-05
        %v1595 = vadd.f32 %v1563, 1e-05
        %v1596 = vadd.f32 %v1564, 1e-05
        %v1597 = vadd.f32 %v1565, 1e-05
        %v1598 = vadd.f32 %v1566, 1e-05
        %v1599 = vadd.f32 %v1567, 1e-05
        %v1600 = vadd.f32 %v1568, 1e-05
        %v1601 = vadd.f32 %v1569, 1e-05
        %v1602 = vadd.f32 %v1570, 1e-05
        %v1603 = vadd.f32 %v1571, 1e-05
        %v1604 = vadd.f32 %v1572, 1e-05
        %v1605 = vadd.f32 %v1573, 1e-05
        %v1606 = vadd.f32 %v1574, 1e-05
        %v1607 = vadd.f32 %v1575, 1e-05
        %v1608 = vadd.f32 %v1576, 1e-05
        %v1609 = vadd.f32 %v1577, 1e-05
        %v1610 = vadd.f32 %v1578, 1e-05
        %v1611 = vadd.f32 %v1579, 1e-05
        %v1612 = vadd.f32 %v1580, 1e-05
        %v1613 = vadd.f32 %v1581, 1e-05
        %v1614 = vadd.f32 %v1582, 1e-05
        %v1615 = vadd.f32 %v1583, 1e-05
        %v1616 = vadd.f32 %v1584, 1e-05
        %v1617 = vadd.f32 %v1585, 1e-05
        %v1618 = vadd.f32 %v1586, 1e-05
        %v1619 = vadd.f32 %v1587, 1e-05
        %v1620 = vadd.f32 %v1588, 1e-05
        %v1621 = vadd.f32 %v1589, 1e-05
        %v1622 = vadd.f32 %v1590, 1e-05
        %v1623 = vrsqrt.pop %v1591
        %v1624 = vrsqrt.pop %v1592
        %v1625 = vrsqrt.pop %v1593
        %v1626 = vrsqrt.pop %v1594
        %v1627 = vrsqrt.pop %v1595
        %v1628 = vrsqrt.pop %v1596
        %v1629 = vrsqrt.pop %v1597
        %v1630 = vrsqrt.pop %v1598
        %v1631 = vrsqrt.pop %v1599
        %v1632 = vrsqrt.pop %v1600
        %v1633 = vrsqrt.pop %v1601
        %v1634 = vrsqrt.pop %v1602
        %v1635 = vrsqrt.pop %v1603
        %v1636 = vrsqrt.pop %v1604
        %v1637 = vrsqrt.pop %v1605
        %v1638 = vrsqrt.pop %v1606
        %v1639 = vrsqrt.pop %v1607
        %v1640 = vrsqrt.pop %v1608
        %v1641 = vrsqrt.pop %v1609
        %v1642 = vrsqrt.pop %v1610
        %v1643 = vrsqrt.pop %v1611
        %v1644 = vrsqrt.pop %v1612
        %v1645 = vrsqrt.pop %v1613
        %v1646 = vrsqrt.pop %v1614
        %v1647 = vrsqrt.pop %v1615
        %v1648 = vrsqrt.pop %v1616
        %v1649 = vrsqrt.pop %v1617
        %v1650 = vrsqrt.pop %v1618
        %v1651 = vrsqrt.pop %v1619
        %v1652 = vrsqrt.pop %v1620
        %v1653 = vrsqrt.pop %v1621
        %v1654 = vrsqrt.pop %v1622
        %v1655 = vld [vmem:[%s3] sm:$0xff]
        %v1656 = vld [vmem:[%s3 + $0x8] sm:$0xff]
        %v1657 = vld [vmem:[%s3 + $0x10] sm:$0xff]
        %v1658 = vld [vmem:[%s3 + $0x18] sm:$0xff]
        %v1659 = vld [vmem:[%s3 + $0x20] sm:$0xff]
        %v1660 = vld [vmem:[%s3 + $0x28] sm:$0xff]
        %v1661 = vld [vmem:[%s3 + $0x30] sm:$0xff]
        %v1662 = vld [vmem:[%s3 + $0x38] sm:$0xff]
        %v1663 = vld [vmem:[%s3 + $0x40] sm:$0xff]
        %v1664 = vld [vmem:[%s3 + $0x48] sm:$0xff]
        %v1665 = vld [vmem:[%s3 + $0x50] sm:$0xff]
        %v1666 = vld [vmem:[%s3 + $0x58] sm:$0xff]
        %v1667 = vld [vmem:[%s3 + $0x60] sm:$0xff]
        %v1668 = vld [vmem:[%s3 + $0x68] sm:$0xff]
        %v1669 = vld [vmem:[%s3 + $0x70] sm:$0xff]
        %v1670 = vld [vmem:[%s3 + $0x78] sm:$0xff]
        %v1671 = vld [vmem:[%s3 + $0x80] sm:$0xff]
        %v1672 = vld [vmem:[%s3 + $0x88] sm:$0xff]
        %v1673 = vld [vmem:[%s3 + $0x90] sm:$0xff]
        %v1674 = vld [vmem:[%s3 + $0x98] sm:$0xff]
        %v1675 = vld [vmem:[%s3 + $0xa0] sm:$0xff]
        %v1676 = vld [vmem:[%s3 + $0xa8] sm:$0xff]
        %v1677 = vld [vmem:[%s3 + $0xb0] sm:$0xff]
        %v1678 = vld [vmem:[%s3 + $0xb8] sm:$0xff]
        %v1679 = vld [vmem:[%s3 + $0xc0] sm:$0xff]
        %v1680 = vld [vmem:[%s3 + $0xc8] sm:$0xff]
        %v1681 = vld [vmem:[%s3 + $0xd0] sm:$0xff]
        %v1682 = vld [vmem:[%s3 + $0xd8] sm:$0xff]
        %v1683 = vld [vmem:[%s3 + $0xe0] sm:$0xff]
        %v1684 = vld [vmem:[%s3 + $0xe8] sm:$0xff]
        %v1685 = vld [vmem:[%s3 + $0xf0] sm:$0xff]
        %v1686 = vld [vmem:[%s3 + $0xf8] sm:$0xff]
        %v1687 = vmul.f32 %v1655, %v1623
        %v1688 = vmul.f32 %v1656, %v1624
        %v1689 = vmul.f32 %v1657, %v1625
        %v1690 = vmul.f32 %v1658, %v1626
        %v1691 = vmul.f32 %v1659, %v1627
        %v1692 = vmul.f32 %v1660, %v1628
        %v1693 = vmul.f32 %v1661, %v1629
        %v1694 = vmul.f32 %v1662, %v1630
        %v1695 = vmul.f32 %v1663, %v1631
        %v1696 = vmul.f32 %v1664, %v1632
        %v1697 = vmul.f32 %v1665, %v1633
        %v1698 = vmul.f32 %v1666, %v1634
        %v1699 = vmul.f32 %v1667, %v1635
        %v1700 = vmul.f32 %v1668, %v1636
        %v1701 = vmul.f32 %v1669, %v1637
        %v1702 = vmul.f32 %v1670, %v1638
        %v1703 = vmul.f32 %v1671, %v1639
        %v1704 = vmul.f32 %v1672, %v1640
        %v1705 = vmul.f32 %v1673, %v1641
        %v1706 = vmul.f32 %v1674, %v1642
        %v1707 = vmul.f32 %v1675, %v1643
        %v1708 = vmul.f32 %v1676, %v1644
        %v1709 = vmul.f32 %v1677, %v1645
        %v1710 = vmul.f32 %v1678, %v1646
        %v1711 = vmul.f32 %v1679, %v1647
        %v1712 = vmul.f32 %v1680, %v1648
        %v1713 = vmul.f32 %v1681, %v1649
        %v1714 = vmul.f32 %v1682, %v1650
        %v1715 = vmul.f32 %v1683, %v1651
        %v1716 = vmul.f32 %v1684, %v1652
        %v1717 = vmul.f32 %v1685, %v1653
        %v1718 = vmul.f32 %v1686, %v1654
        %vm1719 = vcmask 7168
        %1720 = vst.msk [vmem:[#allocation5] sm:$0xff] %vm1719, %v1687
        %1721 = vst.msk [vmem:[#allocation5 + $0x8] sm:$0xff] %vm1719, %v1688
        %1722 = vst.msk [vmem:[#allocation5 + $0x10] sm:$0xff] %vm1719, %v1689
        %1723 = vst.msk [vmem:[#allocation5 + $0x18] sm:$0xff] %vm1719, %v1690
        %1724 = vst.msk [vmem:[#allocation5 + $0x20] sm:$0xff] %vm1719, %v1691
        %1725 = vst.msk [vmem:[#allocation5 + $0x28] sm:$0xff] %vm1719, %v1692
        %1726 = vst.msk [vmem:[#allocation5 + $0x30] sm:$0xff] %vm1719, %v1693
        %1727 = vst.msk [vmem:[#allocation5 + $0x38] sm:$0xff] %vm1719, %v1694
        %1728 = vst.msk [vmem:[#allocation5 + $0x40] sm:$0xff] %vm1719, %v1695
        %1729 = vst.msk [vmem:[#allocation5 + $0x48] sm:$0xff] %vm1719, %v1696
        %1730 = vst.msk [vmem:[#allocation5 + $0x50] sm:$0xff] %vm1719, %v1697
        %1731 = vst.msk [vmem:[#allocation5 + $0x58] sm:$0xff] %vm1719, %v1698
        %1732 = vst.msk [vmem:[#allocation5 + $0x60] sm:$0xff] %vm1719, %v1699
        %1733 = vst.msk [vmem:[#allocation5 + $0x68] sm:$0xff] %vm1719, %v1700
        %1734 = vst.msk [vmem:[#allocation5 + $0x70] sm:$0xff] %vm1719, %v1701
        %1735 = vst.msk [vmem:[#allocation5 + $0x78] sm:$0xff] %vm1719, %v1702
        %1736 = vst.msk [vmem:[#allocation5 + $0x80] sm:$0xff] %vm1719, %v1703
        %1737 = vst.msk [vmem:[#allocation5 + $0x88] sm:$0xff] %vm1719, %v1704
        %1738 = vst.msk [vmem:[#allocation5 + $0x90] sm:$0xff] %vm1719, %v1705
        %1739 = vst.msk [vmem:[#allocation5 + $0x98] sm:$0xff] %vm1719, %v1706
        %1740 = vst.msk [vmem:[#allocation5 + $0xa0] sm:$0xff] %vm1719, %v1707
        %1741 = vst.msk [vmem:[#allocation5 + $0xa8] sm:$0xff] %vm1719, %v1708
        %1742 = vst.msk [vmem:[#allocation5 + $0xb0] sm:$0xff] %vm1719, %v1709
        %1743 = vst.msk [vmem:[#allocation5 + $0xb8] sm:$0xff] %vm1719, %v1710
        %1744 = vst.msk [vmem:[#allocation5 + $0xc0] sm:$0xff] %vm1719, %v1711
        %1745 = vst.msk [vmem:[#allocation5 + $0xc8] sm:$0xff] %vm1719, %v1712
        %1746 = vst.msk [vmem:[#allocation5 + $0xd0] sm:$0xff] %vm1719, %v1713
        %1747 = vst.msk [vmem:[#allocation5 + $0xd8] sm:$0xff] %vm1719, %v1714
        %1748 = vst.msk [vmem:[#allocation5 + $0xe0] sm:$0xff] %vm1719, %v1715
        %1749 = vst.msk [vmem:[#allocation5 + $0xe8] sm:$0xff] %vm1719, %v1716
        %1750 = vst.msk [vmem:[#allocation5 + $0xf0] sm:$0xff] %vm1719, %v1717
        %1751 = vst.msk [vmem:[#allocation5 + $0xf8] sm:$0xff] %vm1719, %v1718
        %v1752 = vld [vmem:[%s4] sm:$0xff]
        %v1753 = vld [vmem:[%s4 + $0x8] sm:$0xff]
        %v1754 = vld [vmem:[%s4 + $0x10] sm:$0xff]
        %v1755 = vld [vmem:[%s4 + $0x18] sm:$0xff]
        %v1756 = vld [vmem:[%s4 + $0x20] sm:$0xff]
        %v1757 = vld [vmem:[%s4 + $0x28] sm:$0xff]
        %v1758 = vld [vmem:[%s4 + $0x30] sm:$0xff]
        %v1759 = vld [vmem:[%s4 + $0x38] sm:$0xff]
        %v1760 = vld [vmem:[%s4 + $0x40] sm:$0xff]
        %v1761 = vld [vmem:[%s4 + $0x48] sm:$0xff]
        %v1762 = vld [vmem:[%s4 + $0x50] sm:$0xff]
        %v1763 = vld [vmem:[%s4 + $0x58] sm:$0xff]
        %v1764 = vld [vmem:[%s4 + $0x60] sm:$0xff]
        %v1765 = vld [vmem:[%s4 + $0x68] sm:$0xff]
        %v1766 = vld [vmem:[%s4 + $0x70] sm:$0xff]
        %v1767 = vld [vmem:[%s4 + $0x78] sm:$0xff]
        %v1768 = vld [vmem:[%s4 + $0x80] sm:$0xff]
        %v1769 = vld [vmem:[%s4 + $0x88] sm:$0xff]
        %v1770 = vld [vmem:[%s4 + $0x90] sm:$0xff]
        %v1771 = vld [vmem:[%s4 + $0x98] sm:$0xff]
        %v1772 = vld [vmem:[%s4 + $0xa0] sm:$0xff]
        %v1773 = vld [vmem:[%s4 + $0xa8] sm:$0xff]
        %v1774 = vld [vmem:[%s4 + $0xb0] sm:$0xff]
        %v1775 = vld [vmem:[%s4 + $0xb8] sm:$0xff]
        %v1776 = vld [vmem:[%s4 + $0xc0] sm:$0xff]
        %v1777 = vld [vmem:[%s4 + $0xc8] sm:$0xff]
        %v1778 = vld [vmem:[%s4 + $0xd0] sm:$0xff]
        %v1779 = vld [vmem:[%s4 + $0xd8] sm:$0xff]
        %v1780 = vld [vmem:[%s4 + $0xe0] sm:$0xff]
        %v1781 = vld [vmem:[%s4 + $0xe8] sm:$0xff]
        %v1782 = vld [vmem:[%s4 + $0xf0] sm:$0xff]
        %v1783 = vld [vmem:[%s4 + $0xf8] sm:$0xff]
        %v1784 = vmul.f32 %v1399, %v1687
        %v1785 = vmul.f32 %v1400, %v1688
        %v1786 = vmul.f32 %v1401, %v1689
        %v1787 = vmul.f32 %v1402, %v1690
        %v1788 = vmul.f32 %v1403, %v1691
        %v1789 = vmul.f32 %v1404, %v1692
        %v1790 = vmul.f32 %v1405, %v1693
        %v1791 = vmul.f32 %v1406, %v1694
        %v1792 = vmul.f32 %v1407, %v1695
        %v1793 = vmul.f32 %v1408, %v1696
        %v1794 = vmul.f32 %v1409, %v1697
        %v1795 = vmul.f32 %v1410, %v1698
        %v1796 = vmul.f32 %v1411, %v1699
        %v1797 = vmul.f32 %v1412, %v1700
        %v1798 = vmul.f32 %v1413, %v1701
        %v1799 = vmul.f32 %v1414, %v1702
        %v1800 = vmul.f32 %v1415, %v1703
        %v1801 = vmul.f32 %v1416, %v1704
        %v1802 = vmul.f32 %v1417, %v1705
        %v1803 = vmul.f32 %v1418, %v1706
        %v1804 = vmul.f32 %v1419, %v1707
        %v1805 = vmul.f32 %v1420, %v1708
        %v1806 = vmul.f32 %v1421, %v1709
        %v1807 = vmul.f32 %v1422, %v1710
        %v1808 = vmul.f32 %v1423, %v1711
        %v1809 = vmul.f32 %v1424, %v1712
        %v1810 = vmul.f32 %v1425, %v1713
        %v1811 = vmul.f32 %v1426, %v1714
        %v1812 = vmul.f32 %v1427, %v1715
        %v1813 = vmul.f32 %v1428, %v1716
        %v1814 = vmul.f32 %v1429, %v1717
        %v1815 = vmul.f32 %v1430, %v1718
        %v1816 = vsub.f32 %v1752, %v1784
        %v1817 = vsub.f32 %v1753, %v1785
        %v1818 = vsub.f32 %v1754, %v1786
        %v1819 = vsub.f32 %v1755, %v1787
        %v1820 = vsub.f32 %v1756, %v1788
        %v1821 = vsub.f32 %v1757, %v1789
        %v1822 = vsub.f32 %v1758, %v1790
        %v1823 = vsub.f32 %v1759, %v1791
        %v1824 = vsub.f32 %v1760, %v1792
        %v1825 = vsub.f32 %v1761, %v1793
        %v1826 = vsub.f32 %v1762, %v1794
        %v1827 = vsub.f32 %v1763, %v1795
        %v1828 = vsub.f32 %v1764, %v1796
        %v1829 = vsub.f32 %v1765, %v1797
        %v1830 = vsub.f32 %v1766, %v1798
        %v1831 = vsub.f32 %v1767, %v1799
        %v1832 = vsub.f32 %v1768, %v1800
        %v1833 = vsub.f32 %v1769, %v1801
        %v1834 = vsub.f32 %v1770, %v1802
        %v1835 = vsub.f32 %v1771, %v1803
        %v1836 = vsub.f32 %v1772, %v1804
        %v1837 = vsub.f32 %v1773, %v1805
        %v1838 = vsub.f32 %v1774, %v1806
        %v1839 = vsub.f32 %v1775, %v1807
        %v1840 = vsub.f32 %v1776, %v1808
        %v1841 = vsub.f32 %v1777, %v1809
        %v1842 = vsub.f32 %v1778, %v1810
        %v1843 = vsub.f32 %v1779, %v1811
        %v1844 = vsub.f32 %v1780, %v1812
        %v1845 = vsub.f32 %v1781, %v1813
        %v1846 = vsub.f32 %v1782, %v1814
        %v1847 = vsub.f32 %v1783, %v1815
        %1848 = vst.msk [vmem:[#allocation6] sm:$0xff] %vm1719, %v1816
        %1849 = vst.msk [vmem:[#allocation6 + $0x8] sm:$0xff] %vm1719, %v1817
        %1850 = vst.msk [vmem:[#allocation6 + $0x10] sm:$0xff] %vm1719, %v1818
        %1851 = vst.msk [vmem:[#allocation6 + $0x18] sm:$0xff] %vm1719, %v1819
        %1852 = vst.msk [vmem:[#allocation6 + $0x20] sm:$0xff] %vm1719, %v1820
        %1853 = vst.msk [vmem:[#allocation6 + $0x28] sm:$0xff] %vm1719, %v1821
        %1854 = vst.msk [vmem:[#allocation6 + $0x30] sm:$0xff] %vm1719, %v1822
        %1855 = vst.msk [vmem:[#allocation6 + $0x38] sm:$0xff] %vm1719, %v1823
        %1856 = vst.msk [vmem:[#allocation6 + $0x40] sm:$0xff] %vm1719, %v1824
        %1857 = vst.msk [vmem:[#allocation6 + $0x48] sm:$0xff] %vm1719, %v1825
        %1858 = vst.msk [vmem:[#allocation6 + $0x50] sm:$0xff] %vm1719, %v1826
        %1859 = vst.msk [vmem:[#allocation6 + $0x58] sm:$0xff] %vm1719, %v1827
        %1860 = vst.msk [vmem:[#allocation6 + $0x60] sm:$0xff] %vm1719, %v1828
        %1861 = vst.msk [vmem:[#allocation6 + $0x68] sm:$0xff] %vm1719, %v1829
        %1862 = vst.msk [vmem:[#allocation6 + $0x70] sm:$0xff] %vm1719, %v1830
        %1863 = vst.msk [vmem:[#allocation6 + $0x78] sm:$0xff] %vm1719, %v1831
        %1864 = vst.msk [vmem:[#allocation6 + $0x80] sm:$0xff] %vm1719, %v1832
        %1865 = vst.msk [vmem:[#allocation6 + $0x88] sm:$0xff] %vm1719, %v1833
        %1866 = vst.msk [vmem:[#allocation6 + $0x90] sm:$0xff] %vm1719, %v1834
        %1867 = vst.msk [vmem:[#allocation6 + $0x98] sm:$0xff] %vm1719, %v1835
        %1868 = vst.msk [vmem:[#allocation6 + $0xa0] sm:$0xff] %vm1719, %v1836
        %1869 = vst.msk [vmem:[#allocation6 + $0xa8] sm:$0xff] %vm1719, %v1837
        %1870 = vst.msk [vmem:[#allocation6 + $0xb0] sm:$0xff] %vm1719, %v1838
        %1871 = vst.msk [vmem:[#allocation6 + $0xb8] sm:$0xff] %vm1719, %v1839
        %1872 = vst.msk [vmem:[#allocation6 + $0xc0] sm:$0xff] %vm1719, %v1840
        %1873 = vst.msk [vmem:[#allocation6 + $0xc8] sm:$0xff] %vm1719, %v1841
        %1874 = vst.msk [vmem:[#allocation6 + $0xd0] sm:$0xff] %vm1719, %v1842
        %1875 = vst.msk [vmem:[#allocation6 + $0xd8] sm:$0xff] %vm1719, %v1843
        %1876 = vst.msk [vmem:[#allocation6 + $0xe0] sm:$0xff] %vm1719, %v1844
        %1877 = vst.msk [vmem:[#allocation6 + $0xe8] sm:$0xff] %vm1719, %v1845
        %1878 = vst.msk [vmem:[#allocation6 + $0xf0] sm:$0xff] %vm1719, %v1846
        %1879 = vst.msk [vmem:[#allocation6 + $0xf8] sm:$0xff] %vm1719, %v1847
      $region60: #{model_forward.1} parent=47 // pred_fallthru
        _
      // Predicated region
      $region61: #{model_forward.1} parent=47 // pred_check
        %p1880 = pneg %p1361
      $region62: #{model_forward.1} parent=47 // pred_check_branch
        %1882 = sbr.rel (%p1880) target = $region64
      $region63: #{model_forward.1} parent=47 // pred_region
        %s1883 = smul.u32 %s23, 256
        %s1884 = scalar_lea.vmem [#allocation2], %s1883
        %v1885 = vld [vmem:[%s1884] sm:$0xff]
        %v1886 = vld [vmem:[%s1884 + $0x8] sm:$0xff]
        %v1887 = vld [vmem:[%s1884 + $0x10] sm:$0xff]
        %v1888 = vld [vmem:[%s1884 + $0x18] sm:$0xff]
        %v1889 = vld [vmem:[%s1884 + $0x20] sm:$0xff]
        %v1890 = vld [vmem:[%s1884 + $0x28] sm:$0xff]
        %v1891 = vld [vmem:[%s1884 + $0x30] sm:$0xff]
        %v1892 = vld [vmem:[%s1884 + $0x38] sm:$0xff]
        %v1893 = vld [vmem:[%s1884 + $0x40] sm:$0xff]
        %v1894 = vld [vmem:[%s1884 + $0x48] sm:$0xff]
        %v1895 = vld [vmem:[%s1884 + $0x50] sm:$0xff]
        %v1896 = vld [vmem:[%s1884 + $0x58] sm:$0xff]
        %v1897 = vld [vmem:[%s1884 + $0x60] sm:$0xff]
        %v1898 = vld [vmem:[%s1884 + $0x68] sm:$0xff]
        %v1899 = vld [vmem:[%s1884 + $0x70] sm:$0xff]
        %v1900 = vld [vmem:[%s1884 + $0x78] sm:$0xff]
        %v1901 = vld [vmem:[%s1884 + $0x80] sm:$0xff]
        %v1902 = vld [vmem:[%s1884 + $0x88] sm:$0xff]
        %v1903 = vld [vmem:[%s1884 + $0x90] sm:$0xff]
        %v1904 = vld [vmem:[%s1884 + $0x98] sm:$0xff]
        %v1905 = vld [vmem:[%s1884 + $0xa0] sm:$0xff]
        %v1906 = vld [vmem:[%s1884 + $0xa8] sm:$0xff]
        %v1907 = vld [vmem:[%s1884 + $0xb0] sm:$0xff]
        %v1908 = vld [vmem:[%s1884 + $0xb8] sm:$0xff]
        %v1909 = vld [vmem:[%s1884 + $0xc0] sm:$0xff]
        %v1910 = vld [vmem:[%s1884 + $0xc8] sm:$0xff]
        %v1911 = vld [vmem:[%s1884 + $0xd0] sm:$0xff]
        %v1912 = vld [vmem:[%s1884 + $0xd8] sm:$0xff]
        %v1913 = vld [vmem:[%s1884 + $0xe0] sm:$0xff]
        %v1914 = vld [vmem:[%s1884 + $0xe8] sm:$0xff]
        %v1915 = vld [vmem:[%s1884 + $0xf0] sm:$0xff]
        %v1916 = vld [vmem:[%s1884 + $0xf8] sm:$0xff]
        %v1917 = vld [vmem:[#allocation5] sm:$0xff]
        %v1918 = vld [vmem:[#allocation5 + $0x8] sm:$0xff]
        %v1919 = vld [vmem:[#allocation5 + $0x10] sm:$0xff]
        %v1920 = vld [vmem:[#allocation5 + $0x18] sm:$0xff]
        %v1921 = vld [vmem:[#allocation5 + $0x20] sm:$0xff]
        %v1922 = vld [vmem:[#allocation5 + $0x28] sm:$0xff]
        %v1923 = vld [vmem:[#allocation5 + $0x30] sm:$0xff]
        %v1924 = vld [vmem:[#allocation5 + $0x38] sm:$0xff]
        %v1925 = vld [vmem:[#allocation5 + $0x40] sm:$0xff]
        %v1926 = vld [vmem:[#allocation5 + $0x48] sm:$0xff]
        %v1927 = vld [vmem:[#allocation5 + $0x50] sm:$0xff]
        %v1928 = vld [vmem:[#allocation5 + $0x58] sm:$0xff]
        %v1929 = vld [vmem:[#allocation5 + $0x60] sm:$0xff]
        %v1930 = vld [vmem:[#allocation5 + $0x68] sm:$0xff]
        %v1931 = vld [vmem:[#allocation5 + $0x70] sm:$0xff]
        %v1932 = vld [vmem:[#allocation5 + $0x78] sm:$0xff]
        %v1933 = vld [vmem:[#allocation5 + $0x80] sm:$0xff]
        %v1934 = vld [vmem:[#allocation5 + $0x88] sm:$0xff]
        %v1935 = vld [vmem:[#allocation5 + $0x90] sm:$0xff]
        %v1936 = vld [vmem:[#allocation5 + $0x98] sm:$0xff]
        %v1937 = vld [vmem:[#allocation5 + $0xa0] sm:$0xff]
        %v1938 = vld [vmem:[#allocation5 + $0xa8] sm:$0xff]
        %v1939 = vld [vmem:[#allocation5 + $0xb0] sm:$0xff]
        %v1940 = vld [vmem:[#allocation5 + $0xb8] sm:$0xff]
        %v1941 = vld [vmem:[#allocation5 + $0xc0] sm:$0xff]
        %v1942 = vld [vmem:[#allocation5 + $0xc8] sm:$0xff]
        %v1943 = vld [vmem:[#allocation5 + $0xd0] sm:$0xff]
        %v1944 = vld [vmem:[#allocation5 + $0xd8] sm:$0xff]
        %v1945 = vld [vmem:[#allocation5 + $0xe0] sm:$0xff]
        %v1946 = vld [vmem:[#allocation5 + $0xe8] sm:$0xff]
        %v1947 = vld [vmem:[#allocation5 + $0xf0] sm:$0xff]
        %v1948 = vld [vmem:[#allocation5 + $0xf8] sm:$0xff]
        %1950 = vset.pattern.permute.xlu0 0
        %1951 = vperm.xlu0 %1950, %v1917
        %v1952 = vpop.permute.xlu0 %1951
        %1955 = vset.pattern.permute.xlu0 0
        %1956 = vperm.xlu0 %1955, %v1918
        %v1957 = vpop.permute.xlu0 %1956
        %1960 = vset.pattern.permute.xlu0 0
        %1961 = vperm.xlu0 %1960, %v1919
        %v1962 = vpop.permute.xlu0 %1961
        %1965 = vset.pattern.permute.xlu0 0
        %1966 = vperm.xlu0 %1965, %v1920
        %v1967 = vpop.permute.xlu0 %1966
        %1970 = vset.pattern.permute.xlu0 0
        %1971 = vperm.xlu0 %1970, %v1921
        %v1972 = vpop.permute.xlu0 %1971
        %1975 = vset.pattern.permute.xlu0 0
        %1976 = vperm.xlu0 %1975, %v1922
        %v1977 = vpop.permute.xlu0 %1976
        %1980 = vset.pattern.permute.xlu0 0
        %1981 = vperm.xlu0 %1980, %v1923
        %v1982 = vpop.permute.xlu0 %1981
        %1985 = vset.pattern.permute.xlu0 0
        %1986 = vperm.xlu0 %1985, %v1924
        %v1987 = vpop.permute.xlu0 %1986
        %1990 = vset.pattern.permute.xlu0 0
        %1991 = vperm.xlu0 %1990, %v1925
        %v1992 = vpop.permute.xlu0 %1991
        %1995 = vset.pattern.permute.xlu0 0
        %1996 = vperm.xlu0 %1995, %v1926
        %v1997 = vpop.permute.xlu0 %1996
        %2000 = vset.pattern.permute.xlu0 0
        %2001 = vperm.xlu0 %2000, %v1927
        %v2002 = vpop.permute.xlu0 %2001
        %2005 = vset.pattern.permute.xlu0 0
        %2006 = vperm.xlu0 %2005, %v1928
        %v2007 = vpop.permute.xlu0 %2006
        %2010 = vset.pattern.permute.xlu0 0
        %2011 = vperm.xlu0 %2010, %v1929
        %v2012 = vpop.permute.xlu0 %2011
        %2015 = vset.pattern.permute.xlu0 0
        %2016 = vperm.xlu0 %2015, %v1930
        %v2017 = vpop.permute.xlu0 %2016
        %2020 = vset.pattern.permute.xlu0 0
        %2021 = vperm.xlu0 %2020, %v1931
        %v2022 = vpop.permute.xlu0 %2021
        %2025 = vset.pattern.permute.xlu0 0
        %2026 = vperm.xlu0 %2025, %v1932
        %v2027 = vpop.permute.xlu0 %2026
        %2030 = vset.pattern.permute.xlu0 0
        %2031 = vperm.xlu0 %2030, %v1933
        %v2032 = vpop.permute.xlu0 %2031
        %2035 = vset.pattern.permute.xlu0 0
        %2036 = vperm.xlu0 %2035, %v1934
        %v2037 = vpop.permute.xlu0 %2036
        %2040 = vset.pattern.permute.xlu0 0
        %2041 = vperm.xlu0 %2040, %v1935
        %v2042 = vpop.permute.xlu0 %2041
        %2045 = vset.pattern.permute.xlu0 0
        %2046 = vperm.xlu0 %2045, %v1936
        %v2047 = vpop.permute.xlu0 %2046
        %2050 = vset.pattern.permute.xlu0 0
        %2051 = vperm.xlu0 %2050, %v1937
        %v2052 = vpop.permute.xlu0 %2051
        %2055 = vset.pattern.permute.xlu0 0
        %2056 = vperm.xlu0 %2055, %v1938
        %v2057 = vpop.permute.xlu0 %2056
        %2060 = vset.pattern.permute.xlu0 0
        %2061 = vperm.xlu0 %2060, %v1939
        %v2062 = vpop.permute.xlu0 %2061
        %2065 = vset.pattern.permute.xlu0 0
        %2066 = vperm.xlu0 %2065, %v1940
        %v2067 = vpop.permute.xlu0 %2066
        %2070 = vset.pattern.permute.xlu0 0
        %2071 = vperm.xlu0 %2070, %v1941
        %v2072 = vpop.permute.xlu0 %2071
        %2075 = vset.pattern.permute.xlu0 0
        %2076 = vperm.xlu0 %2075, %v1942
        %v2077 = vpop.permute.xlu0 %2076
        %2080 = vset.pattern.permute.xlu0 0
        %2081 = vperm.xlu0 %2080, %v1943
        %v2082 = vpop.permute.xlu0 %2081
        %2085 = vset.pattern.permute.xlu0 0
        %2086 = vperm.xlu0 %2085, %v1944
        %v2087 = vpop.permute.xlu0 %2086
        %2090 = vset.pattern.permute.xlu0 0
        %2091 = vperm.xlu0 %2090, %v1945
        %v2092 = vpop.permute.xlu0 %2091
        %2095 = vset.pattern.permute.xlu0 0
        %2096 = vperm.xlu0 %2095, %v1946
        %v2097 = vpop.permute.xlu0 %2096
        %2100 = vset.pattern.permute.xlu0 0
        %2101 = vperm.xlu0 %2100, %v1947
        %v2102 = vpop.permute.xlu0 %2101
        %2105 = vset.pattern.permute.xlu0 0
        %2106 = vperm.xlu0 %2105, %v1948
        %v2107 = vpop.permute.xlu0 %2106
        %v2109 = vmul.f32 %v1885, %v1952
        %v2110 = vmul.f32 %v1886, %v1957
        %v2111 = vmul.f32 %v1887, %v1962
        %v2112 = vmul.f32 %v1888, %v1967
        %v2113 = vmul.f32 %v1889, %v1972
        %v2114 = vmul.f32 %v1890, %v1977
        %v2115 = vmul.f32 %v1891, %v1982
        %v2116 = vmul.f32 %v1892, %v1987
        %v2117 = vmul.f32 %v1893, %v1992
        %v2118 = vmul.f32 %v1894, %v1997
        %v2119 = vmul.f32 %v1895, %v2002
        %v2120 = vmul.f32 %v1896, %v2007
        %v2121 = vmul.f32 %v1897, %v2012
        %v2122 = vmul.f32 %v1898, %v2017
        %v2123 = vmul.f32 %v1899, %v2022
        %v2124 = vmul.f32 %v1900, %v2027
        %v2125 = vmul.f32 %v1901, %v2032
        %v2126 = vmul.f32 %v1902, %v2037
        %v2127 = vmul.f32 %v1903, %v2042
        %v2128 = vmul.f32 %v1904, %v2047
        %v2129 = vmul.f32 %v1905, %v2052
        %v2130 = vmul.f32 %v1906, %v2057
        %v2131 = vmul.f32 %v1907, %v2062
        %v2132 = vmul.f32 %v1908, %v2067
        %v2133 = vmul.f32 %v1909, %v2072
        %v2134 = vmul.f32 %v1910, %v2077
        %v2135 = vmul.f32 %v1911, %v2082
        %v2136 = vmul.f32 %v1912, %v2087
        %v2137 = vmul.f32 %v1913, %v2092
        %v2138 = vmul.f32 %v1914, %v2097
        %v2139 = vmul.f32 %v1915, %v2102
        %v2140 = vmul.f32 %v1916, %v2107
        %v2141 = vld [vmem:[#allocation6] sm:$0xff]
        %v2142 = vld [vmem:[#allocation6 + $0x8] sm:$0xff]
        %v2143 = vld [vmem:[#allocation6 + $0x10] sm:$0xff]
        %v2144 = vld [vmem:[#allocation6 + $0x18] sm:$0xff]
        %v2145 = vld [vmem:[#allocation6 + $0x20] sm:$0xff]
        %v2146 = vld [vmem:[#allocation6 + $0x28] sm:$0xff]
        %v2147 = vld [vmem:[#allocation6 + $0x30] sm:$0xff]
        %v2148 = vld [vmem:[#allocation6 + $0x38] sm:$0xff]
        %v2149 = vld [vmem:[#allocation6 + $0x40] sm:$0xff]
        %v2150 = vld [vmem:[#allocation6 + $0x48] sm:$0xff]
        %v2151 = vld [vmem:[#allocation6 + $0x50] sm:$0xff]
        %v2152 = vld [vmem:[#allocation6 + $0x58] sm:$0xff]
        %v2153 = vld [vmem:[#allocation6 + $0x60] sm:$0xff]
        %v2154 = vld [vmem:[#allocation6 + $0x68] sm:$0xff]
        %v2155 = vld [vmem:[#allocation6 + $0x70] sm:$0xff]
        %v2156 = vld [vmem:[#allocation6 + $0x78] sm:$0xff]
        %v2157 = vld [vmem:[#allocation6 + $0x80] sm:$0xff]
        %v2158 = vld [vmem:[#allocation6 + $0x88] sm:$0xff]
        %v2159 = vld [vmem:[#allocation6 + $0x90] sm:$0xff]
        %v2160 = vld [vmem:[#allocation6 + $0x98] sm:$0xff]
        %v2161 = vld [vmem:[#allocation6 + $0xa0] sm:$0xff]
        %v2162 = vld [vmem:[#allocation6 + $0xa8] sm:$0xff]
        %v2163 = vld [vmem:[#allocation6 + $0xb0] sm:$0xff]
        %v2164 = vld [vmem:[#allocation6 + $0xb8] sm:$0xff]
        %v2165 = vld [vmem:[#allocation6 + $0xc0] sm:$0xff]
        %v2166 = vld [vmem:[#allocation6 + $0xc8] sm:$0xff]
        %v2167 = vld [vmem:[#allocation6 + $0xd0] sm:$0xff]
        %v2168 = vld [vmem:[#allocation6 + $0xd8] sm:$0xff]
        %v2169 = vld [vmem:[#allocation6 + $0xe0] sm:$0xff]
        %v2170 = vld [vmem:[#allocation6 + $0xe8] sm:$0xff]
        %v2171 = vld [vmem:[#allocation6 + $0xf0] sm:$0xff]
        %v2172 = vld [vmem:[#allocation6 + $0xf8] sm:$0xff]
        %2174 = vset.pattern.permute.xlu0 0
        %2175 = vperm.xlu0 %2174, %v2141
        %v2176 = vpop.permute.xlu0 %2175
        %2179 = vset.pattern.permute.xlu0 0
        %2180 = vperm.xlu0 %2179, %v2142
        %v2181 = vpop.permute.xlu0 %2180
        %2184 = vset.pattern.permute.xlu0 0
        %2185 = vperm.xlu0 %2184, %v2143
        %v2186 = vpop.permute.xlu0 %2185
        %2189 = vset.pattern.permute.xlu0 0
        %2190 = vperm.xlu0 %2189, %v2144
        %v2191 = vpop.permute.xlu0 %2190
        %2194 = vset.pattern.permute.xlu0 0
        %2195 = vperm.xlu0 %2194, %v2145
        %v2196 = vpop.permute.xlu0 %2195
        %2199 = vset.pattern.permute.xlu0 0
        %2200 = vperm.xlu0 %2199, %v2146
        %v2201 = vpop.permute.xlu0 %2200
        %2204 = vset.pattern.permute.xlu0 0
        %2205 = vperm.xlu0 %2204, %v2147
        %v2206 = vpop.permute.xlu0 %2205
        %2209 = vset.pattern.permute.xlu0 0
        %2210 = vperm.xlu0 %2209, %v2148
        %v2211 = vpop.permute.xlu0 %2210
        %2214 = vset.pattern.permute.xlu0 0
        %2215 = vperm.xlu0 %2214, %v2149
        %v2216 = vpop.permute.xlu0 %2215
        %2219 = vset.pattern.permute.xlu0 0
        %2220 = vperm.xlu0 %2219, %v2150
        %v2221 = vpop.permute.xlu0 %2220
        %2224 = vset.pattern.permute.xlu0 0
        %2225 = vperm.xlu0 %2224, %v2151
        %v2226 = vpop.permute.xlu0 %2225
        %2229 = vset.pattern.permute.xlu0 0
        %2230 = vperm.xlu0 %2229, %v2152
        %v2231 = vpop.permute.xlu0 %2230
        %2234 = vset.pattern.permute.xlu0 0
        %2235 = vperm.xlu0 %2234, %v2153
        %v2236 = vpop.permute.xlu0 %2235
        %2239 = vset.pattern.permute.xlu0 0
        %2240 = vperm.xlu0 %2239, %v2154
        %v2241 = vpop.permute.xlu0 %2240
        %2244 = vset.pattern.permute.xlu0 0
        %2245 = vperm.xlu0 %2244, %v2155
        %v2246 = vpop.permute.xlu0 %2245
        %2249 = vset.pattern.permute.xlu0 0
        %2250 = vperm.xlu0 %2249, %v2156
        %v2251 = vpop.permute.xlu0 %2250
        %2254 = vset.pattern.permute.xlu0 0
        %2255 = vperm.xlu0 %2254, %v2157
        %v2256 = vpop.permute.xlu0 %2255
        %2259 = vset.pattern.permute.xlu0 0
        %2260 = vperm.xlu0 %2259, %v2158
        %v2261 = vpop.permute.xlu0 %2260
        %2264 = vset.pattern.permute.xlu0 0
        %2265 = vperm.xlu0 %2264, %v2159
        %v2266 = vpop.permute.xlu0 %2265
        %2269 = vset.pattern.permute.xlu0 0
        %2270 = vperm.xlu0 %2269, %v2160
        %v2271 = vpop.permute.xlu0 %2270
        %2274 = vset.pattern.permute.xlu0 0
        %2275 = vperm.xlu0 %2274, %v2161
        %v2276 = vpop.permute.xlu0 %2275
        %2279 = vset.pattern.permute.xlu0 0
        %2280 = vperm.xlu0 %2279, %v2162
        %v2281 = vpop.permute.xlu0 %2280
        %2284 = vset.pattern.permute.xlu0 0
        %2285 = vperm.xlu0 %2284, %v2163
        %v2286 = vpop.permute.xlu0 %2285
        %2289 = vset.pattern.permute.xlu0 0
        %2290 = vperm.xlu0 %2289, %v2164
        %v2291 = vpop.permute.xlu0 %2290
        %2294 = vset.pattern.permute.xlu0 0
        %2295 = vperm.xlu0 %2294, %v2165
        %v2296 = vpop.permute.xlu0 %2295
        %2299 = vset.pattern.permute.xlu0 0
        %2300 = vperm.xlu0 %2299, %v2166
        %v2301 = vpop.permute.xlu0 %2300
        %2304 = vset.pattern.permute.xlu0 0
        %2305 = vperm.xlu0 %2304, %v2167
        %v2306 = vpop.permute.xlu0 %2305
        %2309 = vset.pattern.permute.xlu0 0
        %2310 = vperm.xlu0 %2309, %v2168
        %v2311 = vpop.permute.xlu0 %2310
        %2314 = vset.pattern.permute.xlu0 0
        %2315 = vperm.xlu0 %2314, %v2169
        %v2316 = vpop.permute.xlu0 %2315
        %2319 = vset.pattern.permute.xlu0 0
        %2320 = vperm.xlu0 %2319, %v2170
        %v2321 = vpop.permute.xlu0 %2320
        %2324 = vset.pattern.permute.xlu0 0
        %2325 = vperm.xlu0 %2324, %v2171
        %v2326 = vpop.permute.xlu0 %2325
        %2329 = vset.pattern.permute.xlu0 0
        %2330 = vperm.xlu0 %2329, %v2172
        %v2331 = vpop.permute.xlu0 %2330
        %v2333 = vadd.f32 %v2109, %v2176
        %v2334 = vadd.f32 %v2110, %v2181
        %v2335 = vadd.f32 %v2111, %v2186
        %v2336 = vadd.f32 %v2112, %v2191
        %v2337 = vadd.f32 %v2113, %v2196
        %v2338 = vadd.f32 %v2114, %v2201
        %v2339 = vadd.f32 %v2115, %v2206
        %v2340 = vadd.f32 %v2116, %v2211
        %v2341 = vadd.f32 %v2117, %v2216
        %v2342 = vadd.f32 %v2118, %v2221
        %v2343 = vadd.f32 %v2119, %v2226
        %v2344 = vadd.f32 %v2120, %v2231
        %v2345 = vadd.f32 %v2121, %v2236
        %v2346 = vadd.f32 %v2122, %v2241
        %v2347 = vadd.f32 %v2123, %v2246
        %v2348 = vadd.f32 %v2124, %v2251
        %v2349 = vadd.f32 %v2125, %v2256
        %v2350 = vadd.f32 %v2126, %v2261
        %v2351 = vadd.f32 %v2127, %v2266
        %v2352 = vadd.f32 %v2128, %v2271
        %v2353 = vadd.f32 %v2129, %v2276
        %v2354 = vadd.f32 %v2130, %v2281
        %v2355 = vadd.f32 %v2131, %v2286
        %v2356 = vadd.f32 %v2132, %v2291
        %v2357 = vadd.f32 %v2133, %v2296
        %v2358 = vadd.f32 %v2134, %v2301
        %v2359 = vadd.f32 %v2135, %v2306
        %v2360 = vadd.f32 %v2136, %v2311
        %v2361 = vadd.f32 %v2137, %v2316
        %v2362 = vadd.f32 %v2138, %v2321
        %v2363 = vadd.f32 %v2139, %v2326
        %v2364 = vadd.f32 %v2140, %v2331
        %v2365 = vld [vmem:[%s335] sm:$0xff]
        %v2366 = vld [vmem:[%s335 + $0x8] sm:$0xff]
        %v2367 = vld [vmem:[%s335 + $0x10] sm:$0xff]
        %v2368 = vld [vmem:[%s335 + $0x18] sm:$0xff]
        %v2369 = vld [vmem:[%s335 + $0x20] sm:$0xff]
        %v2370 = vld [vmem:[%s335 + $0x28] sm:$0xff]
        %v2371 = vld [vmem:[%s335 + $0x30] sm:$0xff]
        %v2372 = vld [vmem:[%s335 + $0x38] sm:$0xff]
        %v2373 = vld [vmem:[%s335 + $0x40] sm:$0xff]
        %v2374 = vld [vmem:[%s335 + $0x48] sm:$0xff]
        %v2375 = vld [vmem:[%s335 + $0x50] sm:$0xff]
        %v2376 = vld [vmem:[%s335 + $0x58] sm:$0xff]
        %v2377 = vld [vmem:[%s335 + $0x60] sm:$0xff]
        %v2378 = vld [vmem:[%s335 + $0x68] sm:$0xff]
        %v2379 = vld [vmem:[%s335 + $0x70] sm:$0xff]
        %v2380 = vld [vmem:[%s335 + $0x78] sm:$0xff]
        %v2381 = vld [vmem:[%s335 + $0x80] sm:$0xff]
        %v2382 = vld [vmem:[%s335 + $0x88] sm:$0xff]
        %v2383 = vld [vmem:[%s335 + $0x90] sm:$0xff]
        %v2384 = vld [vmem:[%s335 + $0x98] sm:$0xff]
        %v2385 = vld [vmem:[%s335 + $0xa0] sm:$0xff]
        %v2386 = vld [vmem:[%s335 + $0xa8] sm:$0xff]
        %v2387 = vld [vmem:[%s335 + $0xb0] sm:$0xff]
        %v2388 = vld [vmem:[%s335 + $0xb8] sm:$0xff]
        %v2389 = vld [vmem:[%s335 + $0xc0] sm:$0xff]
        %v2390 = vld [vmem:[%s335 + $0xc8] sm:$0xff]
        %v2391 = vld [vmem:[%s335 + $0xd0] sm:$0xff]
        %v2392 = vld [vmem:[%s335 + $0xd8] sm:$0xff]
        %v2393 = vld [vmem:[%s335 + $0xe0] sm:$0xff]
        %v2394 = vld [vmem:[%s335 + $0xe8] sm:$0xff]
        %v2395 = vld [vmem:[%s335 + $0xf0] sm:$0xff]
        %v2396 = vld [vmem:[%s335 + $0xf8] sm:$0xff]
        %v2397 = vadd.f32 %v2333, %v2365
        %v2398 = vadd.f32 %v2334, %v2366
        %v2399 = vadd.f32 %v2335, %v2367
        %v2400 = vadd.f32 %v2336, %v2368
        %v2401 = vadd.f32 %v2337, %v2369
        %v2402 = vadd.f32 %v2338, %v2370
        %v2403 = vadd.f32 %v2339, %v2371
        %v2404 = vadd.f32 %v2340, %v2372
        %v2405 = vadd.f32 %v2341, %v2373
        %v2406 = vadd.f32 %v2342, %v2374
        %v2407 = vadd.f32 %v2343, %v2375
        %v2408 = vadd.f32 %v2344, %v2376
        %v2409 = vadd.f32 %v2345, %v2377
        %v2410 = vadd.f32 %v2346, %v2378
        %v2411 = vadd.f32 %v2347, %v2379
        %v2412 = vadd.f32 %v2348, %v2380
        %v2413 = vadd.f32 %v2349, %v2381
        %v2414 = vadd.f32 %v2350, %v2382
        %v2415 = vadd.f32 %v2351, %v2383
        %v2416 = vadd.f32 %v2352, %v2384
        %v2417 = vadd.f32 %v2353, %v2385
        %v2418 = vadd.f32 %v2354, %v2386
        %v2419 = vadd.f32 %v2355, %v2387
        %v2420 = vadd.f32 %v2356, %v2388
        %v2421 = vadd.f32 %v2357, %v2389
        %v2422 = vadd.f32 %v2358, %v2390
        %v2423 = vadd.f32 %v2359, %v2391
        %v2424 = vadd.f32 %v2360, %v2392
        %v2425 = vadd.f32 %v2361, %v2393
        %v2426 = vadd.f32 %v2362, %v2394
        %v2427 = vadd.f32 %v2363, %v2395
        %v2428 = vadd.f32 %v2364, %v2396
        %v2429 = vmax.f32 %v2397, 0.0
        %v2430 = vmax.f32 %v2398, 0.0
        %v2431 = vmax.f32 %v2399, 0.0
        %v2432 = vmax.f32 %v2400, 0.0
        %v2433 = vmax.f32 %v2401, 0.0
        %v2434 = vmax.f32 %v2402, 0.0
        %v2435 = vmax.f32 %v2403, 0.0
        %v2436 = vmax.f32 %v2404, 0.0
        %v2437 = vmax.f32 %v2405, 0.0
        %v2438 = vmax.f32 %v2406, 0.0
        %v2439 = vmax.f32 %v2407, 0.0
        %v2440 = vmax.f32 %v2408, 0.0
        %v2441 = vmax.f32 %v2409, 0.0
        %v2442 = vmax.f32 %v2410, 0.0
        %v2443 = vmax.f32 %v2411, 0.0
        %v2444 = vmax.f32 %v2412, 0.0
        %v2445 = vmax.f32 %v2413, 0.0
        %v2446 = vmax.f32 %v2414, 0.0
        %v2447 = vmax.f32 %v2415, 0.0
        %v2448 = vmax.f32 %v2416, 0.0
        %v2449 = vmax.f32 %v2417, 0.0
        %v2450 = vmax.f32 %v2418, 0.0
        %v2451 = vmax.f32 %v2419, 0.0
        %v2452 = vmax.f32 %v2420, 0.0
        %v2453 = vmax.f32 %v2421, 0.0
        %v2454 = vmax.f32 %v2422, 0.0
        %v2455 = vmax.f32 %v2423, 0.0
        %v2456 = vmax.f32 %v2424, 0.0
        %v2457 = vmax.f32 %v2425, 0.0
        %v2458 = vmax.f32 %v2426, 0.0
        %v2459 = vmax.f32 %v2427, 0.0
        %v2460 = vmax.f32 %v2428, 0.0
        %v2461 = vpack.c.bf16 %v2430, %v2429
        %v2462 = vpack.c.bf16 %v2432, %v2431
        %v2463 = vpack.c.bf16 %v2434, %v2433
        %v2464 = vpack.c.bf16 %v2436, %v2435
        %v2465 = vpack.c.bf16 %v2438, %v2437
        %v2466 = vpack.c.bf16 %v2440, %v2439
        %v2467 = vpack.c.bf16 %v2442, %v2441
        %v2468 = vpack.c.bf16 %v2444, %v2443
        %v2469 = vpack.c.bf16 %v2446, %v2445
        %v2470 = vpack.c.bf16 %v2448, %v2447
        %v2471 = vpack.c.bf16 %v2450, %v2449
        %v2472 = vpack.c.bf16 %v2452, %v2451
        %v2473 = vpack.c.bf16 %v2454, %v2453
        %v2474 = vpack.c.bf16 %v2456, %v2455
        %v2475 = vpack.c.bf16 %v2458, %v2457
        %v2476 = vpack.c.bf16 %v2460, %v2459
        %v2477 = vld [vmem:[%s6] sm:$0xff]
        %v2478 = vld [vmem:[%s6 + $0x8] sm:$0xff]
        %v2479 = vld [vmem:[%s6 + $0x10] sm:$0xff]
        %v2480 = vld [vmem:[%s6 + $0x18] sm:$0xff]
        %v2481 = vld [vmem:[%s6 + $0x20] sm:$0xff]
        %v2482 = vld [vmem:[%s6 + $0x28] sm:$0xff]
        %v2483 = vld [vmem:[%s6 + $0x30] sm:$0xff]
        %v2484 = vld [vmem:[%s6 + $0x38] sm:$0xff]
        %v2485 = vld [vmem:[%s6 + $0x40] sm:$0xff]
        %v2486 = vld [vmem:[%s6 + $0x48] sm:$0xff]
        %v2487 = vld [vmem:[%s6 + $0x50] sm:$0xff]
        %v2488 = vld [vmem:[%s6 + $0x58] sm:$0xff]
        %v2489 = vld [vmem:[%s6 + $0x60] sm:$0xff]
        %v2490 = vld [vmem:[%s6 + $0x68] sm:$0xff]
        %v2491 = vld [vmem:[%s6 + $0x70] sm:$0xff]
        %v2492 = vld [vmem:[%s6 + $0x78] sm:$0xff]
        %v2493 = vpack.c.bf16 %v2479, %v2477
        %v2494 = vpack.c.bf16 %v2480, %v2478
        %v2495 = vpack.c.bf16 %v2483, %v2481
        %v2496 = vpack.c.bf16 %v2484, %v2482
        %v2497 = vpack.c.bf16 %v2487, %v2485
        %v2498 = vpack.c.bf16 %v2488, %v2486
        %v2499 = vpack.c.bf16 %v2491, %v2489
        %v2500 = vpack.c.bf16 %v2492, %v2490
        %2501 = vmatprep.subr.bf16.mxu0 0
        %2502 = vmatpush1.bf16.msra.mxu0 %v2461
        %2503 = vmatprep.subr.bf16.mxu0 0
        %2504 = vmatpush1.bf16.msra.mxu0 %v2462
        %2505 = vmatprep.subr.bf16.mxu0 0
        %2506 = vmatpush1.bf16.msra.mxu0 %v2463
        %2507 = vmatprep.subr.bf16.mxu0 0
        %2508 = vmatpush1.bf16.msra.mxu0 %v2464
        %2509 = vmatprep.subr.bf16.mxu0 0
        %2510 = vmatpush1.bf16.msra.mxu0 %v2465
        %2511 = vmatprep.subr.bf16.mxu0 0
        %2512 = vmatpush1.bf16.msra.mxu0 %v2466
        %2513 = vmatprep.subr.bf16.mxu0 0
        %2514 = vmatpush1.bf16.msra.mxu0 %v2467
        %2515 = vmatprep.subr.bf16.mxu0 0
        %2516 = vmatpush1.bf16.msra.mxu0 %v2468
        %2517 = vmatprep.subr.bf16.mxu0 0
        %2518 = vmatpush1.bf16.msra.mxu0 %v2469
        %2519 = vmatprep.subr.bf16.mxu0 0
        %2520 = vmatpush1.bf16.msra.mxu0 %v2470
        %2521 = vmatprep.subr.bf16.mxu0 0
        %2522 = vmatpush1.bf16.msra.mxu0 %v2471
        %2523 = vmatprep.subr.bf16.mxu0 0
        %2524 = vmatpush1.bf16.msra.mxu0 %v2472
        %2525 = vmatprep.subr.bf16.mxu0 0
        %2526 = vmatpush1.bf16.msra.mxu0 %v2473
        %2527 = vmatprep.subr.bf16.mxu0 0
        %2528 = vmatpush1.bf16.msra.mxu0 %v2474
        %2529 = vmatprep.subr.bf16.mxu0 0
        %2530 = vmatpush1.bf16.msra.mxu0 %v2475
        %2531 = vmatprep.subr.bf16.mxu0 0
        %2532 = vmatpush1.bf16.msra.mxu0 %v2476
        %2533 = vmatprep.mubr.bf16.mxu0 %v2494
        %2534 = vmatmul.mubr.bf16.gmra.mrb[0].mxu0 %v2493
        %v2535 = vpop.f32.mrb[0].mxu0
        %v2536 = vadd.f32 0.0, %v2535
        %v2537 = vpop.f32.mrb[0].mxu0
        %v2538 = vpop.f32.mrb[0].mxu0
        %v2539 = vadd.f32 0.0, %v2538
        %v2540 = vpop.f32.mrb[0].mxu0
        %2541 = vmatprep.mubr.bf16.mxu0 %v2496
        %2542 = vmatmul.mubr.bf16.gmra.mrb[0].mxu0 %v2495
        %v2543 = vpop.f32.mrb[0].mxu0
        %v2544 = vadd.f32 0.0, %v2543
        %v2545 = vpop.f32.mrb[0].mxu0
        %v2546 = vpop.f32.mrb[0].mxu0
        %v2547 = vadd.f32 0.0, %v2546
        %v2548 = vpop.f32.mrb[0].mxu0
        %2549 = vmatprep.mubr.bf16.mxu0 %v2498
        %2550 = vmatmul.mubr.bf16.gmra.mrb[0].mxu0 %v2497
        %v2551 = vpop.f32.mrb[0].mxu0
        %v2552 = vadd.f32 0.0, %v2551
        %v2553 = vpop.f32.mrb[0].mxu0
        %v2554 = vpop.f32.mrb[0].mxu0
        %v2555 = vadd.f32 0.0, %v2554
        %v2556 = vpop.f32.mrb[0].mxu0
        %2557 = vmatprep.mubr.bf16.mxu0 %v2500
        %2558 = vmatmul.mubr.bf16.gmra.mrb[0].mxu0 %v2499
        %v2559 = vpop.f32.mrb[0].mxu0
        %v2560 = vadd.f32 0.0, %v2559
        %v2561 = vpop.f32.mrb[0].mxu0
        %v2562 = vpop.f32.mrb[0].mxu0
        %v2563 = vadd.f32 0.0, %v2562
        %v2564 = vpop.f32.mrb[0].mxu0
        %2565 = vdwg.mxu0
        %vm2566 = vcmask 523264
        %2567 = vst.msk [vmem:[%s342] sm:$0xff] %vm2566, %v2536
        %2568 = vst.msk [vmem:[%s342 + $0x8] sm:$0xff] %vm2566, %v2539
        %2569 = vst.msk [vmem:[%s342 + $0x10] sm:$0xff] %vm2566, %v2544
        %2570 = vst.msk [vmem:[%s342 + $0x18] sm:$0xff] %vm2566, %v2547
        %2571 = vst.msk [vmem:[%s342 + $0x20] sm:$0xff] %vm2566, %v2552
        %2572 = vst.msk [vmem:[%s342 + $0x28] sm:$0xff] %vm2566, %v2555
        %2573 = vst.msk [vmem:[%s342 + $0x30] sm:$0xff] %vm2566, %v2560
        %2574 = vst.msk [vmem:[%s342 + $0x38] sm:$0xff] %vm2566, %v2563
      $region64: #{model_forward.1} parent=47 // pred_fallthru
        _
      %s2575 = smul.u32 %s23, %s22
      %p2576 = scmp.lt.s32.totalorder %s2575, 1
      %s2577 = scalar_select %p2576, %s2575, 1
      %s2578 = smul.addr %s2577, 8
      %s2579 = smul.addr %s2578, 8
      %s2580 = scalar_lea.vmem %s7, %s2579
      // Predicated region
      $region65: #{model_forward.1} parent=47 // pred_check
        %p2581 = pneg %p215
      $region66: #{model_forward.1} parent=47 // pred_check_branch
        %2583 = sbr.rel (%p2581) target = $region68
      $region67: #{model_forward.1} parent=47 // pred_region
        %s2584 = smul.u32 %s23, %s22
      $region68: #{model_forward.1} parent=47 // pred_fallthru
        _
    $region48: #{model_forward.1} parent=5 // pred_fallthru
      _
    %p2585 = scmp.le.s32.totalorder 2, %s13
    // Predicated region
    $region69: #{model_forward.1} parent=5 // pred_check
      %p2586 = pneg %p2585
    $region70: #{model_forward.1} parent=5 // pred_check_branch
      %2588 = sbr.rel (%p2586) target = $region72
    $region71: #{model_forward.1} parent=5 // pred_region
      %s2589 = ssub.s32 %s13, 2
      // Predicated region
      $region73: #{model_forward.1} parent=71 // pred_check
        %p2590 = pneg %p221
      $region74: #{model_forward.1} parent=71 // pred_check_branch
        %2592 = sbr.rel (%p2590) target = $region76
      $region75: #{model_forward.1} parent=71 // pred_region
        %s2593 = smul.u32 %s25, %s24
        %p2594 = scmp.lt.s32.totalorder %s2593, 1
        %s2595 = scalar_select %p2594, %s2593, 1
        %s2596 = smul.addr %s2595, 8
        %s2597 = smul.addr %s2596, 8
        %s2598 = scalar_lea.vmem %s7, %s2597
      $region76: #{model_forward.1} parent=71 // pred_fallthru
        _
    $region72: #{model_forward.1} parent=5 // pred_fallthru
      _
  $region6: #{model_forward.1} parent=0 // loop_footer
    %s17 = sadd.s32 1, %s13
  $region7: #{model_forward.1} parent=0 // loop_footer_branch
    %12 = sbr.rel target = $region3
  $region8: #{model_forward.1} parent=0 // loop_exit
    _

</llo_original>
